<compile_context>
chip_gen: v6e
topology: v6e:2x2x1
jax: 0.10.0
libtpu: 0.0.40
codegen_flags: <defaults>
</compile_context>

<pallas_src>
import functools
import inspect

import numpy as np
import jax
import jax.numpy as jnp
from jax.experimental import pallas as pl
from jax.experimental.pallas import tpu as pltpu

LANE = 128
SUBLANE = 8


def _round_up(x, m):
    return (x + m - 1) // m * m


def _ceil_div(a, b):
    return -(-a // b)


# ----------------------------------------------------------------------------
# Pallas kernel: fused two-chain, two-generator MLP pipeline.
#   chain A: y_g  = g(x_A);          y_fg = f([y_g , user_d1])
#   chain B: y_f  = f(x_B);          y_gf = g([y_f , user_d2])
# x_A / x_B already contain the stage-1 user packed in their tail lanes.
# All lane dims are multiples of 128, row dim a multiple of 8.
# ----------------------------------------------------------------------------
def cgn_fused_kernel(
        xA_ref, xB_ref, uA_ref, uB_ref,
        g_w1_ref, g_w1u_ref, g_b1_ref, g_w2_ref, g_b2_ref,
        f_w1_ref, f_w1u_ref, f_b1_ref, f_w2_ref, f_b2_ref,
        pred_g_ref, pred_f_ref, pred_fg_ref, pred_gf_ref):

    def layer2(h, w2, b2):
        h = jnp.maximum(h, 0.0).astype(w2.dtype)
        return jnp.dot(h, w2, preferred_element_type=jnp.float32) + b2

    def stage1(x, w1, b1, w2, b2):
        # x already has the user embedding packed into its tail lanes, so the
        # full (packed) W1 handles both the item and the user contribution.
        h = jnp.dot(x.astype(w1.dtype), w1,
                    preferred_element_type=jnp.float32) + b1
        return layer2(h, w2, b2)

    def stage2(y_prev, u, w1, w1u, b1, w2, b2):
        # y_prev's padded lanes (cols >= di) are exactly zero (padded W2/b2
        # cols are zero), so reusing the full W1 only picks up its item rows;
        # the user contribution is added through the small [e_p, h_p] slab.
        h = jnp.dot(y_prev.astype(w1.dtype), w1,
                    preferred_element_type=jnp.float32)
        h = h + jnp.dot(u, w1u, preferred_element_type=jnp.float32) + b1
        return layer2(h, w2, b2)

    xA = xA_ref[...]
    xB = xB_ref[...]

    # ---- chain A: pred_g = g(item_d1, user_d2); pred_fg = f(pred_g, user_d1)
    y_g = stage1(xA, g_w1_ref[...], g_b1_ref[...], g_w2_ref[...], g_b2_ref[...])
    pred_g_ref[...] = y_g.astype(pred_g_ref.dtype)
    y_fg = stage2(y_g, uA_ref[...], f_w1_ref[...], f_w1u_ref[...],
                  f_b1_ref[...], f_w2_ref[...], f_b2_ref[...])
    pred_fg_ref[...] = y_fg.astype(pred_fg_ref.dtype)

    # ---- chain B: pred_f = f(item_d2, user_d1); pred_gf = g(pred_f, user_d2)
    y_f = stage1(xB, f_w1_ref[...], f_b1_ref[...], f_w2_ref[...], f_b2_ref[...])
    pred_f_ref[...] = y_f.astype(pred_f_ref.dtype)
    y_gf = stage2(y_f, uB_ref[...], g_w1_ref[...], g_w1u_ref[...],
                  g_b1_ref[...], g_w2_ref[...], g_b2_ref[...])
    pred_gf_ref[...] = y_gf.astype(pred_gf_ref.dtype)


# ----------------------------------------------------------------------------
# Wrapper: packs/pads activations, builds BlockSpecs, calls the fused kernel.
# ----------------------------------------------------------------------------
def cgn_fused_chains(item_d1, item_d2, user_d1, user_d2, g_pad, f_pad, *,
                     num_items, edim, act_dtype=jnp.bfloat16,
                     out_dtype=jnp.float32, min_row_blocks=1):
    """Runs both generator chains in one pallas_call.

    item_d*: [B*num_items, edim]   user_d*: [B, edim]
    returns (pred_g, pred_f, pred_fg, pred_gf) each [B, num_items*edim]
    """
    B = user_d1.shape[0]
    di = num_items * edim
    din = di + edim
    P, h_p = g_pad["w1"].shape           # padded combined K / output N
    e_p = g_pad["w1u"].shape[0]          # padded user width

    # Row tiling: minimize padding, cap at 256 rows per tile; min_row_blocks>1
    # guarantees >=2 parallel grid steps (useful on v7x megacore).
    nblk = max(min_row_blocks, _ceil_div(B, 256))
    tm = _round_up(_ceil_div(B, nblk), SUBLANE)
    b_p = nblk * tm
    grid = (nblk,)

    def pack(items, user):
        # bf16 before padding to halve the wrapper-side HBM round trip.
        x = jnp.concatenate(
            [items.reshape(B, di).astype(act_dtype), user.astype(act_dtype)],
            axis=1)
        return jnp.pad(x, ((0, b_p - B), (0, P - din)))

    xA = pack(item_d1, user_d2)          # chain A, stage-1 input (g)
    xB = pack(item_d2, user_d1)          # chain B, stage-1 input (f)
    uA = jnp.pad(user_d1.astype(act_dtype), ((0, b_p - B), (0, e_p - edim)))
    uB = jnp.pad(user_d2.astype(act_dtype), ((0, b_p - B), (0, e_p - edim)))

    def row_spec(cols):
        return pl.BlockSpec((tm, cols), lambda i: (i, 0))

    def weight_spec(shape):
        # Grid-invariant weights: single-buffer them (no pointless double
        # buffering of tensors whose block index never changes).
        kwargs = {}
        if hasattr(pl, "Buffered"):
            try:
                if "pipeline_mode" in inspect.signature(pl.BlockSpec).parameters:
                    kwargs["pipeline_mode"] = pl.Buffered(1)
            except (TypeError, ValueError):
                pass
        return pl.BlockSpec(shape, lambda i: (0, 0), **kwargs)

    def gen_specs(p):
        return [weight_spec(p["w1"].shape), weight_spec(p["w1u"].shape),
                weight_spec(p["b1"].shape), weight_spec(p["w2"].shape),
                weight_spec(p["b2"].shape)]

    # --- derive VMEM budget and cost estimate from the actual padded shapes.
    w_isz = g_pad["w1"].dtype.itemsize
    a_isz = np.dtype(act_dtype).itemsize
    o_isz = np.dtype(out_dtype).itemsize

    weight_bytes = 2 * ((P * h_p + e_p * h_p + h_p * P) * w_isz + (h_p + P) * 4)
    act_in_bytes = (2 * b_p * P + 2 * b_p * e_p) * a_isz
    out_bytes = 4 * b_p * P * o_isz

    tile_bytes = 2 * ((2 * tm * P + 2 * tm * e_p) * a_isz + 4 * tm * P * o_isz)
    scratch_bytes = 6 * tm * max(P, h_p) * 4          # live f32 intermediates
    vmem_limit = min(96 * 1024 * 1024,
                     max(32 * 1024 * 1024,
                         int(1.5 * (weight_bytes + tile_bytes + scratch_bytes))))

    cost = pl.CostEstimate(
        flops=4 * b_p * h_p * (4 * P + e_p),
        transcendentals=0,
        bytes_accessed=weight_bytes + act_in_bytes + out_bytes)

    outs = pl.pallas_call(
        cgn_fused_kernel,
        out_shape=tuple(jax.ShapeDtypeStruct((b_p, P), out_dtype)
                        for _ in range(4)),
        grid=grid,
        in_specs=[row_spec(P), row_spec(P), row_spec(e_p), row_spec(e_p)]
                 + gen_specs(g_pad) + gen_specs(f_pad),
        out_specs=tuple(row_spec(P) for _ in range(4)),
        compiler_params=pltpu.CompilerParams(
            dimension_semantics=("parallel",),
            vmem_limit_bytes=vmem_limit),
        cost_estimate=cost,
    )(xA, xB, uA, uB,
      g_pad["w1"], g_pad["w1u"], g_pad["b1"], g_pad["w2"], g_pad["b2"],
      f_pad["w1"], f_pad["w1u"], f_pad["b1"], f_pad["w2"], f_pad["b2"])

    pred_g, pred_f, pred_fg, pred_gf = outs
    return (pred_g[:B, :di], pred_f[:B, :di],
            pred_fg[:B, :di], pred_gf[:B, :di])


# ----------------------------------------------------------------------------
# Parameter construction (deterministic, in-script)
# ----------------------------------------------------------------------------
def init_generator_params(key, num_items, edim, hidden):
    di = num_items * edim
    din = di + edim
    dout = di
    k1, k2 = jax.random.split(key)
    w1 = jax.random.normal(k1, (din, hidden), jnp.float32) * (1.0 / jnp.sqrt(din))
    b1 = jnp.zeros((hidden,), jnp.float32)
    w2 = jax.random.normal(k2, (hidden, dout), jnp.float32) * (1.0 / jnp.sqrt(hidden))
    b2 = jnp.zeros((dout,), jnp.float32)
    return {"w1": w1, "b1": b1, "w2": w2, "b2": b2}


def pad_generator_params(p, *, num_items, edim, weight_dtype=jnp.bfloat16):
    """Pads the generator weights lane-dense.

    w1  : [P, h_p]  full packed first layer (item rows then user rows at di..)
    w1u : [e_p, h_p] copy of the user rows (for the chained second stage)
    w2  : [h_p, P]   output columns [0:di] valid, padded columns EXACTLY zero
                     (this invariant is what makes the chained reuse of w1
                     correct — do not break it).
    """
    di = num_items * edim
    din = di + edim
    hidden = p["w1"].shape[1]
    P = _round_up(din, LANE)
    h_p = _round_up(hidden, LANE)
    e_p = _round_up(edim, LANE)

    w1 = jnp.zeros((P, h_p), weight_dtype)
    w1 = w1.at[:din, :hidden].set(p["w1"].astype(weight_dtype))
    w1u = jnp.zeros((e_p, h_p), weight_dtype)
    w1u = w1u.at[:edim, :hidden].set(p["w1"][di:din].astype(weight_dtype))
    b1 = jnp.zeros((1, h_p), jnp.float32).at[:, :hidden].set(p["b1"][None, :])
    w2 = jnp.zeros((h_p, P), weight_dtype)
    w2 = w2.at[:hidden, :di].set(p["w2"].astype(weight_dtype))
    b2 = jnp.zeros((1, P), jnp.float32).at[:, :di].set(p["b2"][None, :])
    return {"w1": w1, "w1u": w1u, "b1": b1, "w2": w2, "b2": b2}


def init_cgn_params(key, *, num_users, num_item_d1, num_item_d2,
                    num_items, edim, hidden):
    keys = jax.random.split(key, 6)
    return {
        "U_d1": jax.random.normal(keys[0], (num_users, edim), jnp.float32) * 0.1,
        "U_d2": jax.random.normal(keys[1], (num_users, edim), jnp.float32) * 0.1,
        "V_d1": jax.random.normal(keys[2], (num_item_d1, edim), jnp.float32) * 0.1,
        "V_d2": jax.random.normal(keys[3], (num_item_d2, edim), jnp.float32) * 0.1,
        "g": init_generator_params(keys[4], num_items, edim, hidden),
        "f": init_generator_params(keys[5], num_items, edim, hidden),
    }


def prepare_cgn_params(params, *, num_items, edim, weight_dtype=jnp.bfloat16):
    """Pre-pad generator weights once (outside jit). bf16 weights halve the
    weight DMA/VMEM bytes and use the native bf16 MXU path; accumulation
    inside the kernel stays f32."""
    return {
        "U_d1": params["U_d1"], "U_d2": params["U_d2"],
        "V_d1": params["V_d1"], "V_d2": params["V_d2"],
        "g_pad": pad_generator_params(params["g"], num_items=num_items,
                                      edim=edim, weight_dtype=weight_dtype),
        "f_pad": pad_generator_params(params["f"], num_items=num_items,
                                      edim=edim, weight_dtype=weight_dtype),
    }


# ----------------------------------------------------------------------------
# CGN forward (mirrors CGN.forward in the PyTorch module)
# ----------------------------------------------------------------------------
def cgn_forward(params, user_idx, item_d1_idx, item_d2_idx, *, num_items, edim):
    # Embedding lookups (glue, plain JAX).
    user_d1 = params["U_d1"][user_idx]        # [B, edim]
    user_d2 = params["U_d2"][user_idx]        # [B, edim]
    item_d1 = params["V_d1"][item_d1_idx]     # [B*num_items, edim]
    item_d2 = params["V_d2"][item_d2_idx]     # [B*num_items, edim]

    pred_g, pred_f, pred_fg, pred_gf = cgn_fused_chains(
        item_d1, item_d2, user_d1, user_d2,
        params["g_pad"], params["f_pad"], num_items=num_items, edim=edim)

    return (pred_g.reshape(-1, edim), pred_f.reshape(-1, edim),
            pred_fg.reshape(-1, edim), pred_gf.reshape(-1, edim),
            item_d1, item_d2)


# ----------------------------------------------------------------------------
# Reference (pure f32 jnp, unpadded) for sanity check
# ----------------------------------------------------------------------------
def generator_ref(items, user, p, *, num_items, edim):
    B = user.shape[0]
    x = jnp.concatenate([items.reshape(B, num_items * edim), user], axis=1)
    h = jnp.maximum(x @ p["w1"] + p["b1"][None, :], 0.0)
    return h @ p["w2"] + p["b2"][None, :]


if __name__ == "__main__":
    # Small synthetic configuration consistent with the module's forward().
    B = 2            # batch of users
    NUM_ITEMS = 4    # items per user (config['num_items'])
    EDIM = 8         # embedding dim (config['edim'])
    HIDDEN = 64      # generator hidden width (assumed)
    NUM_USERS = 10
    NUM_ITEM_D1 = 20
    NUM_ITEM_D2 = 24

    key = jax.random.PRNGKey(0)
    kp, ku, k1, k2 = jax.random.split(key, 4)

    raw_params = init_cgn_params(
        kp, num_users=NUM_USERS, num_item_d1=NUM_ITEM_D1,
        num_item_d2=NUM_ITEM_D2, num_items=NUM_ITEMS,
        edim=EDIM, hidden=HIDDEN)
    params = prepare_cgn_params(raw_params, num_items=NUM_ITEMS, edim=EDIM,
                                weight_dtype=jnp.bfloat16)

    user_idx = jax.random.randint(ku, (B,), 0, NUM_USERS)
    item_d1_idx = jax.random.randint(k1, (B * NUM_ITEMS,), 0, NUM_ITEM_D1)
    item_d2_idx = jax.random.randint(k2, (B * NUM_ITEMS,), 0, NUM_ITEM_D2)

    fwd = jax.jit(functools.partial(cgn_forward, num_items=NUM_ITEMS, edim=EDIM))
    outs = fwd(params, user_idx, item_d1_idx, item_d2_idx)
    outs = jax.block_until_ready(outs)

    pred_g, pred_f, pred_fg, pred_gf, item_d1, item_d2 = outs
    assert pred_g.shape == (B * NUM_ITEMS, EDIM)
    assert pred_f.shape == (B * NUM_ITEMS, EDIM)
    assert pred_fg.shape == (B * NUM_ITEMS, EDIM)
    assert pred_gf.shape == (B * NUM_ITEMS, EDIM)
    assert item_d1.shape == (B * NUM_ITEMS, EDIM)
    assert item_d2.shape == (B * NUM_ITEMS, EDIM)

    # Cross-check the fused Pallas kernel against a pure-f32 jnp reference.
    # (Kernel uses bf16 weights/activations, hence the loosened tolerance.)
    u_d1 = raw_params["U_d1"][user_idx]
    u_d2 = raw_params["U_d2"][user_idx]
    it_d1 = raw_params["V_d1"][item_d1_idx]
    it_d2 = raw_params["V_d2"][item_d2_idx]
    gref = functools.partial(generator_ref, num_items=NUM_ITEMS, edim=EDIM)

    ref_g = gref(it_d1, u_d2, raw_params["g"])
    ref_f = gref(it_d2, u_d1, raw_params["f"])
    ref_fg = gref(ref_g.reshape(-1, EDIM), u_d1, raw_params["f"])
    ref_gf = gref(ref_f.reshape(-1, EDIM), u_d2, raw_params["g"])

    assert jnp.allclose(pred_g, ref_g.reshape(-1, EDIM), atol=2e-2, rtol=2e-2)
    assert jnp.allclose(pred_f, ref_f.reshape(-1, EDIM), atol=2e-2, rtol=2e-2)
    assert jnp.allclose(pred_fg, ref_fg.reshape(-1, EDIM), atol=3e-2, rtol=3e-2)
    assert jnp.allclose(pred_gf, ref_gf.reshape(-1, EDIM), atol=3e-2, rtol=3e-2)

    print("KERNEL_OK")
</pallas_src>

<mosaic_0001>
module attributes {stable_mosaic.version = 11 : i64} {
  func.func @cgn_fused_kernel(%arg0: i32, %arg1: memref<8x128xbf16, #tpu.memory_space<vmem>>, %arg2: memref<8x128xbf16, #tpu.memory_space<vmem>>, %arg3: memref<8x128xbf16, #tpu.memory_space<vmem>>, %arg4: memref<8x128xbf16, #tpu.memory_space<vmem>>, %arg5: memref<128x128xbf16, #tpu.memory_space<vmem>>, %arg6: memref<128x128xbf16, #tpu.memory_space<vmem>>, %arg7: memref<1x128xf32, #tpu.memory_space<vmem>>, %arg8: memref<128x128xbf16, #tpu.memory_space<vmem>>, %arg9: memref<1x128xf32, #tpu.memory_space<vmem>>, %arg10: memref<128x128xbf16, #tpu.memory_space<vmem>>, %arg11: memref<128x128xbf16, #tpu.memory_space<vmem>>, %arg12: memref<1x128xf32, #tpu.memory_space<vmem>>, %arg13: memref<128x128xbf16, #tpu.memory_space<vmem>>, %arg14: memref<1x128xf32, #tpu.memory_space<vmem>>, %arg15: memref<8x128xf32, #tpu.memory_space<vmem>>, %arg16: memref<8x128xf32, #tpu.memory_space<vmem>>, %arg17: memref<8x128xf32, #tpu.memory_space<vmem>>, %arg18: memref<8x128xf32, #tpu.memory_space<vmem>>) attributes {dimension_semantics = [#tpu.dimension_semantics<parallel>], iteration_bounds = array<i64: 1>, scalar_prefetch = 0 : i64, scratch_operands = 0 : i64, tpu.core_type = #tpu.core_type<tc>, window_params = [{transform_indices = @transform_0, window_bounds = array<i64: 8, 128>}, {transform_indices = @transform_1, window_bounds = array<i64: 8, 128>}, {transform_indices = @transform_2, window_bounds = array<i64: 8, 128>}, {transform_indices = @transform_3, window_bounds = array<i64: 8, 128>}, {pipeline_mode = #tpu.pipeline_mode<synchronous>, transform_indices = @transform_4, window_bounds = array<i64: 128, 128>}, {pipeline_mode = #tpu.pipeline_mode<synchronous>, transform_indices = @transform_5, window_bounds = array<i64: 128, 128>}, {pipeline_mode = #tpu.pipeline_mode<synchronous>, transform_indices = @transform_6, window_bounds = array<i64: 1, 128>}, {pipeline_mode = #tpu.pipeline_mode<synchronous>, transform_indices = @transform_7, window_bounds = array<i64: 128, 128>}, {pipeline_mode = #tpu.pipeline_mode<synchronous>, transform_indices = @transform_8, window_bounds = array<i64: 1, 128>}, {pipeline_mode = #tpu.pipeline_mode<synchronous>, transform_indices = @transform_9, window_bounds = array<i64: 128, 128>}, {pipeline_mode = #tpu.pipeline_mode<synchronous>, transform_indices = @transform_10, window_bounds = array<i64: 128, 128>}, {pipeline_mode = #tpu.pipeline_mode<synchronous>, transform_indices = @transform_11, window_bounds = array<i64: 1, 128>}, {pipeline_mode = #tpu.pipeline_mode<synchronous>, transform_indices = @transform_12, window_bounds = array<i64: 128, 128>}, {pipeline_mode = #tpu.pipeline_mode<synchronous>, transform_indices = @transform_13, window_bounds = array<i64: 1, 128>}, {transform_indices = @transform_14, window_bounds = array<i64: 8, 128>}, {transform_indices = @transform_15, window_bounds = array<i64: 8, 128>}, {transform_indices = @transform_16, window_bounds = array<i64: 8, 128>}, {transform_indices = @transform_17, window_bounds = array<i64: 8, 128>}]} {
    %c0 = arith.constant 0 : index
    %c0_0 = arith.constant 0 : index
    %0 = vector.load %arg1[%c0, %c0_0] : memref<8x128xbf16, #tpu.memory_space<vmem>>, vector<8x128xbf16>
    %c0_1 = arith.constant 0 : index
    %c0_2 = arith.constant 0 : index
    %1 = vector.load %arg2[%c0_1, %c0_2] : memref<8x128xbf16, #tpu.memory_space<vmem>>, vector<8x128xbf16>
    %c0_3 = arith.constant 0 : index
    %c0_4 = arith.constant 0 : index
    %2 = vector.load %arg5[%c0_3, %c0_4] : memref<128x128xbf16, #tpu.memory_space<vmem>>, vector<128x128xbf16>
    %c0_5 = arith.constant 0 : index
    %c0_6 = arith.constant 0 : index
    %3 = vector.load %arg7[%c0_5, %c0_6] : memref<1x128xf32, #tpu.memory_space<vmem>>, vector<1x128xf32>
    %c0_7 = arith.constant 0 : index
    %c0_8 = arith.constant 0 : index
    %4 = vector.load %arg8[%c0_7, %c0_8] : memref<128x128xbf16, #tpu.memory_space<vmem>>, vector<128x128xbf16>
    %c0_9 = arith.constant 0 : index
    %c0_10 = arith.constant 0 : index
    %5 = vector.load %arg9[%c0_9, %c0_10] : memref<1x128xf32, #tpu.memory_space<vmem>>, vector<1x128xf32>
    %cst = arith.constant dense<0.000000e+00> : vector<8x128xf32>
    %6 = tpu.matmul %0, %2, %cst {dimension_numbers = #tpu.dot_dimension_numbers<[1], [0], [0], [1], [0, 0, 1, 1], [], []>} : vector<8x128xbf16>, vector<128x128xbf16>, vector<8x128xf32> -> vector<8x128xf32>
    %7 = vector.broadcast %3 : vector<1x128xf32> to vector<8x128xf32>
    %8 = arith.addf %6, %7 : vector<8x128xf32>
    %cst_11 = arith.constant 0.000000e+00 : f32
    %9 = vector.broadcast %cst_11 : f32 to vector<8x128xf32>
    %10 = arith.maximumf %8, %9 : vector<8x128xf32>
    %11 = arith.truncf %10 : vector<8x128xf32> to vector<8x128xbf16>
    %cst_12 = arith.constant dense<0.000000e+00> : vector<8x128xf32>
    %12 = tpu.matmul %11, %4, %cst_12 {dimension_numbers = #tpu.dot_dimension_numbers<[1], [0], [0], [1], [0, 0, 1, 1], [], []>} : vector<8x128xbf16>, vector<128x128xbf16>, vector<8x128xf32> -> vector<8x128xf32>
    %13 = vector.broadcast %5 : vector<1x128xf32> to vector<8x128xf32>
    %14 = arith.addf %12, %13 : vector<8x128xf32>
    %c0_13 = arith.constant 0 : index
    %c0_14 = arith.constant 0 : index
    %15 = vector.load %arg15[%c0_13, %c0_14] : memref<8x128xf32, #tpu.memory_space<vmem>>, vector<8x128xf32>
    tpu.vector_store %arg15[%c0_13, %c0_14], %14 {strides = array<i32>} : memref<8x128xf32, #tpu.memory_space<vmem>>, vector<8x128xf32>,
    %c0_15 = arith.constant 0 : index
    %c0_16 = arith.constant 0 : index
    %16 = vector.load %arg3[%c0_15, %c0_16] : memref<8x128xbf16, #tpu.memory_space<vmem>>, vector<8x128xbf16>
    %c0_17 = arith.constant 0 : index
    %c0_18 = arith.constant 0 : index
    %17 = vector.load %arg10[%c0_17, %c0_18] : memref<128x128xbf16, #tpu.memory_space<vmem>>, vector<128x128xbf16>
    %c0_19 = arith.constant 0 : index
    %c0_20 = arith.constant 0 : index
    %18 = vector.load %arg11[%c0_19, %c0_20] : memref<128x128xbf16, #tpu.memory_space<vmem>>, vector<128x128xbf16>
    %c0_21 = arith.constant 0 : index
    %c0_22 = arith.constant 0 : index
    %19 = vector.load %arg12[%c0_21, %c0_22] : memref<1x128xf32, #tpu.memory_space<vmem>>, vector<1x128xf32>
    %c0_23 = arith.constant 0 : index
    %c0_24 = arith.constant 0 : index
    %20 = vector.load %arg13[%c0_23, %c0_24] : memref<128x128xbf16, #tpu.memory_space<vmem>>, vector<128x128xbf16>
    %c0_25 = arith.constant 0 : index
    %c0_26 = arith.constant 0 : index
    %21 = vector.load %arg14[%c0_25, %c0_26] : memref<1x128xf32, #tpu.memory_space<vmem>>, vector<1x128xf32>
    %22 = arith.truncf %14 : vector<8x128xf32> to vector<8x128xbf16>
    %cst_27 = arith.constant dense<0.000000e+00> : vector<8x128xf32>
    %23 = tpu.matmul %22, %17, %cst_27 {dimension_numbers = #tpu.dot_dimension_numbers<[1], [0], [0], [1], [0, 0, 1, 1], [], []>} : vector<8x128xbf16>, vector<128x128xbf16>, vector<8x128xf32> -> vector<8x128xf32>
    %cst_28 = arith.constant dense<0.000000e+00> : vector<8x128xf32>
    %24 = tpu.matmul %16, %18, %cst_28 {dimension_numbers = #tpu.dot_dimension_numbers<[1], [0], [0], [1], [0, 0, 1, 1], [], []>} : vector<8x128xbf16>, vector<128x128xbf16>, vector<8x128xf32> -> vector<8x128xf32>
    %25 = arith.addf %23, %24 : vector<8x128xf32>
    %26 = vector.broadcast %19 : vector<1x128xf32> to vector<8x128xf32>
    %27 = arith.addf %25, %26 : vector<8x128xf32>
    %cst_29 = arith.constant 0.000000e+00 : f32
    %28 = vector.broadcast %cst_29 : f32 to vector<8x128xf32>
    %29 = arith.maximumf %27, %28 : vector<8x128xf32>
    %30 = arith.truncf %29 : vector<8x128xf32> to vector<8x128xbf16>
    %cst_30 = arith.constant dense<0.000000e+00> : vector<8x128xf32>
    %31 = tpu.matmul %30, %20, %cst_30 {dimension_numbers = #tpu.dot_dimension_numbers<[1], [0], [0], [1], [0, 0, 1, 1], [], []>} : vector<8x128xbf16>, vector<128x128xbf16>, vector<8x128xf32> -> vector<8x128xf32>
    %32 = vector.broadcast %21 : vector<1x128xf32> to vector<8x128xf32>
    %33 = arith.addf %31, %32 : vector<8x128xf32>
    %c0_31 = arith.constant 0 : index
    %c0_32 = arith.constant 0 : index
    %34 = vector.load %arg17[%c0_31, %c0_32] : memref<8x128xf32, #tpu.memory_space<vmem>>, vector<8x128xf32>
    tpu.vector_store %arg17[%c0_31, %c0_32], %33 {strides = array<i32>} : memref<8x128xf32, #tpu.memory_space<vmem>>, vector<8x128xf32>,
    %c0_33 = arith.constant 0 : index
    %c0_34 = arith.constant 0 : index
    %35 = vector.load %arg10[%c0_33, %c0_34] : memref<128x128xbf16, #tpu.memory_space<vmem>>, vector<128x128xbf16>
    %c0_35 = arith.constant 0 : index
    %c0_36 = arith.constant 0 : index
    %36 = vector.load %arg12[%c0_35, %c0_36] : memref<1x128xf32, #tpu.memory_space<vmem>>, vector<1x128xf32>
    %c0_37 = arith.constant 0 : index
    %c0_38 = arith.constant 0 : index
    %37 = vector.load %arg13[%c0_37, %c0_38] : memref<128x128xbf16, #tpu.memory_space<vmem>>, vector<128x128xbf16>
    %c0_39 = arith.constant 0 : index
    %c0_40 = arith.constant 0 : index
    %38 = vector.load %arg14[%c0_39, %c0_40] : memref<1x128xf32, #tpu.memory_space<vmem>>, vector<1x128xf32>
    %cst_41 = arith.constant dense<0.000000e+00> : vector<8x128xf32>
    %39 = tpu.matmul %1, %35, %cst_41 {dimension_numbers = #tpu.dot_dimension_numbers<[1], [0], [0], [1], [0, 0, 1, 1], [], []>} : vector<8x128xbf16>, vector<128x128xbf16>, vector<8x128xf32> -> vector<8x128xf32>
    %40 = vector.broadcast %36 : vector<1x128xf32> to vector<8x128xf32>
    %41 = arith.addf %39, %40 : vector<8x128xf32>
    %cst_42 = arith.constant 0.000000e+00 : f32
    %42 = vector.broadcast %cst_42 : f32 to vector<8x128xf32>
    %43 = arith.maximumf %41, %42 : vector<8x128xf32>
    %44 = arith.truncf %43 : vector<8x128xf32> to vector<8x128xbf16>
    %cst_43 = arith.constant dense<0.000000e+00> : vector<8x128xf32>
    %45 = tpu.matmul %44, %37, %cst_43 {dimension_numbers = #tpu.dot_dimension_numbers<[1], [0], [0], [1], [0, 0, 1, 1], [], []>} : vector<8x128xbf16>, vector<128x128xbf16>, vector<8x128xf32> -> vector<8x128xf32>
    %46 = vector.broadcast %38 : vector<1x128xf32> to vector<8x128xf32>
    %47 = arith.addf %45, %46 : vector<8x128xf32>
    %c0_44 = arith.constant 0 : index
    %c0_45 = arith.constant 0 : index
    %48 = vector.load %arg16[%c0_44, %c0_45] : memref<8x128xf32, #tpu.memory_space<vmem>>, vector<8x128xf32>
    tpu.vector_store %arg16[%c0_44, %c0_45], %47 {strides = array<i32>} : memref<8x128xf32, #tpu.memory_space<vmem>>, vector<8x128xf32>,
    %c0_46 = arith.constant 0 : index
    %c0_47 = arith.constant 0 : index
    %49 = vector.load %arg4[%c0_46, %c0_47] : memref<8x128xbf16, #tpu.memory_space<vmem>>, vector<8x128xbf16>
    %c0_48 = arith.constant 0 : index
    %c0_49 = arith.constant 0 : index
    %50 = vector.load %arg5[%c0_48, %c0_49] : memref<128x128xbf16, #tpu.memory_space<vmem>>, vector<128x128xbf16>
    %c0_50 = arith.constant 0 : index
    %c0_51 = arith.constant 0 : index
    %51 = vector.load %arg6[%c0_50, %c0_51] : memref<128x128xbf16, #tpu.memory_space<vmem>>, vector<128x128xbf16>
    %c0_52 = arith.constant 0 : index
    %c0_53 = arith.constant 0 : index
    %52 = vector.load %arg7[%c0_52, %c0_53] : memref<1x128xf32, #tpu.memory_space<vmem>>, vector<1x128xf32>
    %c0_54 = arith.constant 0 : index
    %c0_55 = arith.constant 0 : index
    %53 = vector.load %arg8[%c0_54, %c0_55] : memref<128x128xbf16, #tpu.memory_space<vmem>>, vector<128x128xbf16>
    %c0_56 = arith.constant 0 : index
    %c0_57 = arith.constant 0 : index
    %54 = vector.load %arg9[%c0_56, %c0_57] : memref<1x128xf32, #tpu.memory_space<vmem>>, vector<1x128xf32>
    %55 = arith.truncf %47 : vector<8x128xf32> to vector<8x128xbf16>
    %cst_58 = arith.constant dense<0.000000e+00> : vector<8x128xf32>
    %56 = tpu.matmul %55, %50, %cst_58 {dimension_numbers = #tpu.dot_dimension_numbers<[1], [0], [0], [1], [0, 0, 1, 1], [], []>} : vector<8x128xbf16>, vector<128x128xbf16>, vector<8x128xf32> -> vector<8x128xf32>
    %cst_59 = arith.constant dense<0.000000e+00> : vector<8x128xf32>
    %57 = tpu.matmul %49, %51, %cst_59 {dimension_numbers = #tpu.dot_dimension_numbers<[1], [0], [0], [1], [0, 0, 1, 1], [], []>} : vector<8x128xbf16>, vector<128x128xbf16>, vector<8x128xf32> -> vector<8x128xf32>
    %58 = arith.addf %56, %57 : vector<8x128xf32>
    %59 = vector.broadcast %52 : vector<1x128xf32> to vector<8x128xf32>
    %60 = arith.addf %58, %59 : vector<8x128xf32>
    %cst_60 = arith.constant 0.000000e+00 : f32
    %61 = vector.broadcast %cst_60 : f32 to vector<8x128xf32>
    %62 = arith.maximumf %60, %61 : vector<8x128xf32>
    %63 = arith.truncf %62 : vector<8x128xf32> to vector<8x128xbf16>
    %cst_61 = arith.constant dense<0.000000e+00> : vector<8x128xf32>
    %64 = tpu.matmul %63, %53, %cst_61 {dimension_numbers = #tpu.dot_dimension_numbers<[1], [0], [0], [1], [0, 0, 1, 1], [], []>} : vector<8x128xbf16>, vector<128x128xbf16>, vector<8x128xf32> -> vector<8x128xf32>
    %65 = vector.broadcast %54 : vector<1x128xf32> to vector<8x128xf32>
    %66 = arith.addf %64, %65 : vector<8x128xf32>
    %c0_62 = arith.constant 0 : index
    %c0_63 = arith.constant 0 : index
    %67 = vector.load %arg18[%c0_62, %c0_63] : memref<8x128xf32, #tpu.memory_space<vmem>>, vector<8x128xf32>
    tpu.vector_store %arg18[%c0_62, %c0_63], %66 {strides = array<i32>} : memref<8x128xf32, #tpu.memory_space<vmem>>, vector<8x128xf32>,
    return
  }
  func.func @transform_0(%arg0: i32) -> (i32, i32) {
    %c0_i32 = arith.constant 0 : i32
    %c0_i32_0 = arith.constant 0 : i32
    return %arg0, %c0_i32 : i32, i32
  }
  func.func @transform_1(%arg0: i32) -> (i32, i32) {
    %c0_i32 = arith.constant 0 : i32
    %c0_i32_0 = arith.constant 0 : i32
    return %arg0, %c0_i32 : i32, i32
  }
  func.func @transform_2(%arg0: i32) -> (i32, i32) {
    %c0_i32 = arith.constant 0 : i32
    %c0_i32_0 = arith.constant 0 : i32
    return %arg0, %c0_i32 : i32, i32
  }
  func.func @transform_3(%arg0: i32) -> (i32, i32) {
    %c0_i32 = arith.constant 0 : i32
    %c0_i32_0 = arith.constant 0 : i32
    return %arg0, %c0_i32 : i32, i32
  }
  func.func @transform_4(%arg0: i32) -> (i32, i32) {
    %c0_i32 = arith.constant 0 : i32
    %c0_i32_0 = arith.constant 0 : i32
    %c0_i32_1 = arith.constant 0 : i32
    return %c0_i32, %c0_i32_0 : i32, i32
  }
  func.func @transform_5(%arg0: i32) -> (i32, i32) {
    %c0_i32 = arith.constant 0 : i32
    %c0_i32_0 = arith.constant 0 : i32
    %c0_i32_1 = arith.constant 0 : i32
    return %c0_i32, %c0_i32_0 : i32, i32
  }
  func.func @transform_6(%arg0: i32) -> (i32, i32) {
    %c0_i32 = arith.constant 0 : i32
    %c0_i32_0 = arith.constant 0 : i32
    %c0_i32_1 = arith.constant 0 : i32
    return %c0_i32, %c0_i32_0 : i32, i32
  }
  func.func @transform_7(%arg0: i32) -> (i32, i32) {
    %c0_i32 = arith.constant 0 : i32
    %c0_i32_0 = arith.constant 0 : i32
    %c0_i32_1 = arith.constant 0 : i32
    return %c0_i32, %c0_i32_0 : i32, i32
  }
  func.func @transform_8(%arg0: i32) -> (i32, i32) {
    %c0_i32 = arith.constant 0 : i32
    %c0_i32_0 = arith.constant 0 : i32
    %c0_i32_1 = arith.constant 0 : i32
    return %c0_i32, %c0_i32_0 : i32, i32
  }
  func.func @transform_9(%arg0: i32) -> (i32, i32) {
    %c0_i32 = arith.constant 0 : i32
    %c0_i32_0 = arith.constant 0 : i32
    %c0_i32_1 = arith.constant 0 : i32
    return %c0_i32, %c0_i32_0 : i32, i32
  }
  func.func @transform_10(%arg0: i32) -> (i32, i32) {
    %c0_i32 = arith.constant 0 : i32
    %c0_i32_0 = arith.constant 0 : i32
    %c0_i32_1 = arith.constant 0 : i32
    return %c0_i32, %c0_i32_0 : i32, i32
  }
  func.func @transform_11(%arg0: i32) -> (i32, i32) {
    %c0_i32 = arith.constant 0 : i32
    %c0_i32_0 = arith.constant 0 : i32
    %c0_i32_1 = arith.constant 0 : i32
    return %c0_i32, %c0_i32_0 : i32, i32
  }
  func.func @transform_12(%arg0: i32) -> (i32, i32) {
    %c0_i32 = arith.constant 0 : i32
    %c0_i32_0 = arith.constant 0 : i32
    %c0_i32_1 = arith.constant 0 : i32
    return %c0_i32, %c0_i32_0 : i32, i32
  }
  func.func @transform_13(%arg0: i32) -> (i32, i32) {
    %c0_i32 = arith.constant 0 : i32
    %c0_i32_0 = arith.constant 0 : i32
    %c0_i32_1 = arith.constant 0 : i32
    return %c0_i32, %c0_i32_0 : i32, i32
  }
  func.func @transform_14(%arg0: i32) -> (i32, i32) {
    %c0_i32 = arith.constant 0 : i32
    %c0_i32_0 = arith.constant 0 : i32
    return %arg0, %c0_i32 : i32, i32
  }
  func.func @transform_15(%arg0: i32) -> (i32, i32) {
    %c0_i32 = arith.constant 0 : i32
    %c0_i32_0 = arith.constant 0 : i32
    return %arg0, %c0_i32 : i32, i32
  }
  func.func @transform_16(%arg0: i32) -> (i32, i32) {
    %c0_i32 = arith.constant 0 : i32
    %c0_i32_0 = arith.constant 0 : i32
    return %arg0, %c0_i32 : i32, i32
  }
  func.func @transform_17(%arg0: i32) -> (i32, i32) {
    %c0_i32 = arith.constant 0 : i32
    %c0_i32_0 = arith.constant 0 : i32
    return %arg0, %c0_i32 : i32, i32
  }
}

</mosaic_0001>

<llo_original>
// kernel: cgn_forward.1
$region0: #{cgn_forward.1}
  #allocation0 [shape = 'u32[]', space=smem, size = 0x4, offset = 0x4, fixed_abs, tag = 'smem constant byte address 0x4 - core index']
  #allocation1 [shape = 'u32[144,128]{1,0:T(1,128)}', space=vmem, size = 0x12000, scoped, tag = 'internal scratch']
  %s0 = inlined_call_operand.vmem [shape: bf16[8,128], index: 0, kind: input, shape index: {}]
  %s1 = inlined_call_operand.vmem [shape: bf16[8,128], index: 1, kind: input, shape index: {}]
  %s2 = inlined_call_operand.vmem [shape: bf16[8,128], index: 2, kind: input, shape index: {}]
  %s3 = inlined_call_operand.vmem [shape: bf16[8,128], index: 3, kind: input, shape index: {}]
  %s4 = inlined_call_operand.vmem [shape: bf16[128,128], index: 4, kind: input, shape index: {}]
  %s5 = inlined_call_operand.vmem [shape: bf16[128,128], index: 5, kind: input, shape index: {}]
  %s6 = inlined_call_operand.vmem [shape: f32[1,128], index: 6, kind: input, shape index: {}]
  %s7 = inlined_call_operand.vmem [shape: bf16[128,128], index: 7, kind: input, shape index: {}]
  %s8 = inlined_call_operand.vmem [shape: f32[1,128], index: 8, kind: input, shape index: {}]
  %s9 = inlined_call_operand.vmem [shape: bf16[128,128], index: 9, kind: input, shape index: {}]
  %s10 = inlined_call_operand.vmem [shape: bf16[128,128], index: 10, kind: input, shape index: {}]
  %s11 = inlined_call_operand.vmem [shape: f32[1,128], index: 11, kind: input, shape index: {}]
  %s12 = inlined_call_operand.hbm [shape: bf16[128,128], index: 12, kind: input, shape index: {}]
  %s13 = inlined_call_operand.vmem [shape: f32[1,128], index: 13, kind: input, shape index: {}]
  %s14 = inlined_call_operand.vmem [shape: f32[8,128], index: 14, kind: output, shape index: {0}]
  %s15 = inlined_call_operand.vmem [shape: f32[8,128], index: 15, kind: output, shape index: {1}]
  %s16 = inlined_call_operand.vmem [shape: f32[8,128], index: 16, kind: output, shape index: {2}]
  %s17 = inlined_call_operand.vmem [shape: f32[8,128], index: 17, kind: output, shape index: {3}]
  %18 = xla_tuple %s14, %s15, %s16, %s17
  %s19 = sld [smem:[#allocation0]]
  $region94: #{cgn_forward.1} parent=0
    _
  %s21 = ssub.s32 1, %s19
  %s22 = scalar_select 0, %s21, %s19
  $region1: #{cgn_forward.1} parent=0
    #allocation2 [shape = 'u8[32768]{0}', space=vmem, size = 0x8000, scoped, tag = 'input window, operand 12, single buffered']
    #allocation3 [shape = 's32[1]{0}', space=sflag, size = 0x4, scoped, tag = 'scoped memory for cgn_forward.1']
    %23 = vsyncpa [#allocation3], 0
    // Predicated region
    $region2: #{cgn_forward.1} parent=1 // pred_check
      _
    $region3: #{cgn_forward.1} parent=1 // pred_check_branch
      %25 = sbr.rel (0) target = $region5
    $region4: #{cgn_forward.1} parent=1 // pred_region
      _
    $region5: #{cgn_forward.1} parent=1 // pred_fallthru
      _
    // Predicated region
    $region6: #{cgn_forward.1} parent=1 // pred_check
      _
    $region7: #{cgn_forward.1} parent=1 // pred_check_branch
      %27 = sbr.rel (0) target = $region9
    $region8: #{cgn_forward.1} parent=1 // pred_region
      _
    $region9: #{cgn_forward.1} parent=1 // pred_fallthru
      _
    // Predicated region
    $region10: #{cgn_forward.1} parent=1 // pred_check
      _
    $region11: #{cgn_forward.1} parent=1 // pred_check_branch
      %29 = sbr.rel (0) target = $region13
    $region12: #{cgn_forward.1} parent=1 // pred_region
      _
    $region13: #{cgn_forward.1} parent=1 // pred_fallthru
      _
    // Predicated region
    $region14: #{cgn_forward.1} parent=1 // pred_check
      _
    $region15: #{cgn_forward.1} parent=1 // pred_check_branch
      %31 = sbr.rel (0) target = $region17
    $region16: #{cgn_forward.1} parent=1 // pred_region
      _
    $region17: #{cgn_forward.1} parent=1 // pred_fallthru
      _
    // Predicated region
    $region18: #{cgn_forward.1} parent=1 // pred_check
      _
    $region19: #{cgn_forward.1} parent=1 // pred_check_branch
      %33 = sbr.rel (0) target = $region21
    $region20: #{cgn_forward.1} parent=1 // pred_region
      _
    $region21: #{cgn_forward.1} parent=1 // pred_fallthru
      _
    // Predicated region
    $region22: #{cgn_forward.1} parent=1 // pred_check
      _
    $region23: #{cgn_forward.1} parent=1 // pred_check_branch
      %35 = sbr.rel (0) target = $region25
    $region24: #{cgn_forward.1} parent=1 // pred_region
      _
    $region25: #{cgn_forward.1} parent=1 // pred_fallthru
      _
    // Predicated region
    $region26: #{cgn_forward.1} parent=1 // pred_check
      _
    $region27: #{cgn_forward.1} parent=1 // pred_check_branch
      %37 = sbr.rel (0) target = $region29
    $region28: #{cgn_forward.1} parent=1 // pred_region
      _
    $region29: #{cgn_forward.1} parent=1 // pred_fallthru
      _
    // Predicated region
    $region30: #{cgn_forward.1} parent=1 // pred_check
      _
    $region31: #{cgn_forward.1} parent=1 // pred_check_branch
      %39 = sbr.rel (0) target = $region33
    $region32: #{cgn_forward.1} parent=1 // pred_region
      _
    $region33: #{cgn_forward.1} parent=1 // pred_fallthru
      _
    // Predicated region
    $region34: #{cgn_forward.1} parent=1 // pred_check
      _
    $region35: #{cgn_forward.1} parent=1 // pred_check_branch
      %41 = sbr.rel (0) target = $region37
    $region36: #{cgn_forward.1} parent=1 // pred_region
      _
    $region37: #{cgn_forward.1} parent=1 // pred_fallthru
      _
    // Predicated region
    $region38: #{cgn_forward.1} parent=1 // pred_check
      _
    $region39: #{cgn_forward.1} parent=1 // pred_check_branch
      %43 = sbr.rel (0) target = $region41
    $region40: #{cgn_forward.1} parent=1 // pred_region
      _
    $region41: #{cgn_forward.1} parent=1 // pred_fallthru
      _
    // Predicated region
    $region42: #{cgn_forward.1} parent=1 // pred_check
      _
    $region43: #{cgn_forward.1} parent=1 // pred_check_branch
      %45 = sbr.rel (0) target = $region45
    $region44: #{cgn_forward.1} parent=1 // pred_region
      _
    $region45: #{cgn_forward.1} parent=1 // pred_fallthru
      _
    // Predicated region
    $region46: #{cgn_forward.1} parent=1 // pred_check
      _
    $region47: #{cgn_forward.1} parent=1 // pred_check_branch
      %47 = sbr.rel (0) target = $region49
    $region48: #{cgn_forward.1} parent=1 // pred_region
      _
    $region49: #{cgn_forward.1} parent=1 // pred_fallthru
      _
    // Predicated region
    $region50: #{cgn_forward.1} parent=1 // pred_check
      _
    $region51: #{cgn_forward.1} parent=1 // pred_check_branch
      %49 = sbr.rel (0) target = $region53
    $region52: #{cgn_forward.1} parent=1 // pred_region
      %s51 = ssub.s32 1024, 1024
      %52 = vsyncadd [#allocation3], %s51
      %s53 = sshll.u32 [#allocation2], 4
      %s54 = int_to_ptr.vmem [resolvable:$true] %s53
      %59 = dma.hbm_to_vmem [thread:$0]  %s12, 1024, %s54, [#allocation3], 64, 64, 4
    $region53: #{cgn_forward.1} parent=1 // pred_fallthru
      _
    // Predicated region
    $region54: #{cgn_forward.1} parent=1 // pred_check
      _
    $region55: #{cgn_forward.1} parent=1 // pred_check_branch
      %61 = sbr.rel (0) target = $region57
    $region56: #{cgn_forward.1} parent=1 // pred_region
      _
    $region57: #{cgn_forward.1} parent=1 // pred_fallthru
      _
    // Predicated region
    $region58: #{cgn_forward.1} parent=1 // pred_check
      _
    $region59: #{cgn_forward.1} parent=1 // pred_check_branch
      %63 = sbr.rel (0) target = $region61
    $region60: #{cgn_forward.1} parent=1 // pred_region
      %64 = dma.done [#allocation3], 1024
    $region61: #{cgn_forward.1} parent=1 // pred_fallthru
      _
    %v66 = vld [vmem:[%s0] sm:$0xf]
    %v67 = vld [vmem:[%s1] sm:$0xf]
    %v68 = vld [vmem:[%s4] sm:$0xf]
    %v69 = vld [vmem:[%s4 + $0x4] sm:$0xf]
    %v70 = vld [vmem:[%s4 + $0x8] sm:$0xf]
    %v71 = vld [vmem:[%s4 + $0xc] sm:$0xf]
    %v72 = vld [vmem:[%s4 + $0x10] sm:$0xf]
    %v73 = vld [vmem:[%s4 + $0x14] sm:$0xf]
    %v74 = vld [vmem:[%s4 + $0x18] sm:$0xf]
    %v75 = vld [vmem:[%s4 + $0x1c] sm:$0xf]
    %v76 = vld [vmem:[%s4 + $0x20] sm:$0xf]
    %v77 = vld [vmem:[%s4 + $0x24] sm:$0xf]
    %v78 = vld [vmem:[%s4 + $0x28] sm:$0xf]
    %v79 = vld [vmem:[%s4 + $0x2c] sm:$0xf]
    %v80 = vld [vmem:[%s4 + $0x30] sm:$0xf]
    %v81 = vld [vmem:[%s4 + $0x34] sm:$0xf]
    %v82 = vld [vmem:[%s4 + $0x38] sm:$0xf]
    %v83 = vld [vmem:[%s4 + $0x3c] sm:$0xf]
    %v84 = vld [vmem:[%s6] sm:$0x1]
    %v85 = vld [vmem:[%s7] sm:$0xf]
    %v86 = vld [vmem:[%s7 + $0x4] sm:$0xf]
    %v87 = vld [vmem:[%s7 + $0x8] sm:$0xf]
    %v88 = vld [vmem:[%s7 + $0xc] sm:$0xf]
    %v89 = vld [vmem:[%s7 + $0x10] sm:$0xf]
    %v90 = vld [vmem:[%s7 + $0x14] sm:$0xf]
    %v91 = vld [vmem:[%s7 + $0x18] sm:$0xf]
    %v92 = vld [vmem:[%s7 + $0x1c] sm:$0xf]
    %v93 = vld [vmem:[%s7 + $0x20] sm:$0xf]
    %v94 = vld [vmem:[%s7 + $0x24] sm:$0xf]
    %v95 = vld [vmem:[%s7 + $0x28] sm:$0xf]
    %v96 = vld [vmem:[%s7 + $0x2c] sm:$0xf]
    %v97 = vld [vmem:[%s7 + $0x30] sm:$0xf]
    %v98 = vld [vmem:[%s7 + $0x34] sm:$0xf]
    %v99 = vld [vmem:[%s7 + $0x38] sm:$0xf]
    %v100 = vld [vmem:[%s7 + $0x3c] sm:$0xf]
    %v101 = vld [vmem:[%s8] sm:$0x1]
    %v103 = vlaneseq
    %v104 = vshrl.u32 %v103, 7
    %v105 = vsub.s32 0, %v104
    %v106 = vrot.slane %v84, %v105
    %v124 = vunpack.c.l.b16 %v68
    %v125 = vunpack.c.l.b16 %v69
    %v126 = vunpack.c.l.b16 %v70
    %v127 = vunpack.c.l.b16 %v71
    %v128 = vunpack.c.l.b16 %v72
    %v129 = vunpack.c.l.b16 %v73
    %v130 = vunpack.c.l.b16 %v74
    %v131 = vunpack.c.l.b16 %v75
    %v132 = vunpack.c.l.b16 %v76
    %v133 = vunpack.c.l.b16 %v77
    %v134 = vunpack.c.l.b16 %v78
    %v135 = vunpack.c.l.b16 %v79
    %v136 = vunpack.c.l.b16 %v80
    %v137 = vunpack.c.l.b16 %v81
    %v138 = vunpack.c.l.b16 %v82
    %v139 = vunpack.c.l.b16 %v83
    %v140 = vpack.c.b16 %v125, %v124
    %v141 = vpack.c.b16 %v127, %v126
    %v142 = vpack.c.b16 %v129, %v128
    %v143 = vpack.c.b16 %v131, %v130
    %v144 = vpack.c.b16 %v133, %v132
    %v145 = vpack.c.b16 %v135, %v134
    %v146 = vpack.c.b16 %v137, %v136
    %v147 = vpack.c.b16 %v139, %v138
    %156 = vmatprep.subr.bf16.mxu0 0
    %157 = vmatpush1.bf16.msra.mxu0 %v147
    %158 = vmatprep.subr.bf16.mxu0 0
    %159 = vmatpush1.bf16.msra.mxu0 %v146
    %160 = vmatprep.subr.bf16.mxu0 0
    %161 = vmatpush1.bf16.msra.mxu0 %v145
    %162 = vmatprep.subr.bf16.mxu0 0
    %163 = vmatpush1.bf16.msra.mxu0 %v144
    %164 = vmatprep.subr.bf16.mxu0 0
    %165 = vmatpush1.bf16.msra.mxu0 %v143
    %166 = vmatprep.subr.bf16.mxu0 0
    %167 = vmatpush1.bf16.msra.mxu0 %v142
    %168 = vmatprep.subr.bf16.mxu0 0
    %169 = vmatpush1.bf16.msra.mxu0 %v141
    %170 = vmatprep.subr.bf16.mxu0 0
    %171 = vmatpush1.bf16.msra.mxu0 %v140
    %172 = vmatprep.subr.bf16.mxu0 0
    %173 = vmatpush2.bf16.msra.mxu0 0
    %174 = vmatprep.subr.bf16.mxu0 0
    %175 = vmatpush2.bf16.msra.mxu0 0
    %176 = vmatprep.subr.bf16.mxu0 0
    %177 = vmatpush2.bf16.msra.mxu0 0
    %178 = vmatprep.subr.bf16.mxu0 0
    %179 = vmatpush2.bf16.msra.mxu0 0
    %180 = vmatprep.subr.bf16.mxu0 0
    %181 = vmatpush2.bf16.msra.mxu0 0
    %182 = vmatprep.subr.bf16.mxu0 0
    %183 = vmatpush2.bf16.msra.mxu0 0
    %184 = vmatprep.subr.bf16.mxu0 0
    %185 = vmatpush2.bf16.msra.mxu0 0
    %186 = vmatprep.subr.bf16.mxu0 0
    %187 = vmatpush2.bf16.msra.mxu0 0
    %188 = vmatprep.mubr.bf16.mxu0 0
    %189 = vmatmul.mubr.bf16.gmra.mxu0 %v66
    %v190 = vpop.f32.mrf.mxu0
    %v191 = vadd.f32 %v106, %v190
    %v192 = vpop.f32.mrf.mxu0
    %v193 = vpop.f32.mrf.mxu0
    %v194 = vpop.f32.mrf.mxu0
    %195 = vdwg.mxu0
    %v196 = vmax.f32 %v191, 0.0
    %v197 = vpack.c.bf16 %v196, %v196
    %v199 = vlaneseq
    %v200 = vshrl.u32 %v199, 7
    %v201 = vsub.s32 0, %v200
    %v202 = vrot.slane %v101, %v201
    %v220 = vunpack.c.l.b16 %v85
    %v221 = vunpack.c.l.b16 %v86
    %v222 = vunpack.c.l.b16 %v87
    %v223 = vunpack.c.l.b16 %v88
    %v224 = vunpack.c.l.b16 %v89
    %v225 = vunpack.c.l.b16 %v90
    %v226 = vunpack.c.l.b16 %v91
    %v227 = vunpack.c.l.b16 %v92
    %v228 = vunpack.c.l.b16 %v93
    %v229 = vunpack.c.l.b16 %v94
    %v230 = vunpack.c.l.b16 %v95
    %v231 = vunpack.c.l.b16 %v96
    %v232 = vunpack.c.l.b16 %v97
    %v233 = vunpack.c.l.b16 %v98
    %v234 = vunpack.c.l.b16 %v99
    %v235 = vunpack.c.l.b16 %v100
    %v236 = vpack.c.b16 %v221, %v220
    %v237 = vpack.c.b16 %v223, %v222
    %v238 = vpack.c.b16 %v225, %v224
    %v239 = vpack.c.b16 %v227, %v226
    %v240 = vpack.c.b16 %v229, %v228
    %v241 = vpack.c.b16 %v231, %v230
    %v242 = vpack.c.b16 %v233, %v232
    %v243 = vpack.c.b16 %v235, %v234
    %252 = vmatprep.subr.bf16.mxu0 0
    %253 = vmatpush1.bf16.msra.mxu0 %v243
    %254 = vmatprep.subr.bf16.mxu0 0
    %255 = vmatpush1.bf16.msra.mxu0 %v242
    %256 = vmatprep.subr.bf16.mxu0 0
    %257 = vmatpush1.bf16.msra.mxu0 %v241
    %258 = vmatprep.subr.bf16.mxu0 0
    %259 = vmatpush1.bf16.msra.mxu0 %v240
    %260 = vmatprep.subr.bf16.mxu0 0
    %261 = vmatpush1.bf16.msra.mxu0 %v239
    %262 = vmatprep.subr.bf16.mxu0 0
    %263 = vmatpush1.bf16.msra.mxu0 %v238
    %264 = vmatprep.subr.bf16.mxu0 0
    %265 = vmatpush1.bf16.msra.mxu0 %v237
    %266 = vmatprep.subr.bf16.mxu0 0
    %267 = vmatpush1.bf16.msra.mxu0 %v236
    %268 = vmatprep.subr.bf16.mxu0 0
    %269 = vmatpush2.bf16.msra.mxu0 0
    %270 = vmatprep.subr.bf16.mxu0 0
    %271 = vmatpush2.bf16.msra.mxu0 0
    %272 = vmatprep.subr.bf16.mxu0 0
    %273 = vmatpush2.bf16.msra.mxu0 0
    %274 = vmatprep.subr.bf16.mxu0 0
    %275 = vmatpush2.bf16.msra.mxu0 0
    %276 = vmatprep.subr.bf16.mxu0 0
    %277 = vmatpush2.bf16.msra.mxu0 0
    %278 = vmatprep.subr.bf16.mxu0 0
    %279 = vmatpush2.bf16.msra.mxu0 0
    %280 = vmatprep.subr.bf16.mxu0 0
    %281 = vmatpush2.bf16.msra.mxu0 0
    %282 = vmatprep.subr.bf16.mxu0 0
    %283 = vmatpush2.bf16.msra.mxu0 0
    %284 = vmatprep.mubr.bf16.mxu0 0
    %285 = vmatmul.mubr.bf16.gmra.mxu0 %v197
    %v286 = vpop.f32.mrf.mxu0
    %v287 = vadd.f32 %v202, %v286
    %v288 = vpop.f32.mrf.mxu0
    %v289 = vpop.f32.mrf.mxu0
    %v290 = vpop.f32.mrf.mxu0
    %291 = vdwg.mxu0
    %292 = vst [vmem:[%s14] sm:$0xff] %v287
    %v293 = vld [vmem:[%s2] sm:$0xf]
    %v294 = vld [vmem:[%s9] sm:$0xf]
    %v295 = vld [vmem:[%s9 + $0x4] sm:$0xf]
    %v296 = vld [vmem:[%s9 + $0x8] sm:$0xf]
    %v297 = vld [vmem:[%s9 + $0xc] sm:$0xf]
    %v298 = vld [vmem:[%s9 + $0x10] sm:$0xf]
    %v299 = vld [vmem:[%s9 + $0x14] sm:$0xf]
    %v300 = vld [vmem:[%s9 + $0x18] sm:$0xf]
    %v301 = vld [vmem:[%s9 + $0x1c] sm:$0xf]
    %v302 = vld [vmem:[%s9 + $0x20] sm:$0xf]
    %v303 = vld [vmem:[%s9 + $0x24] sm:$0xf]
    %v304 = vld [vmem:[%s9 + $0x28] sm:$0xf]
    %v305 = vld [vmem:[%s9 + $0x2c] sm:$0xf]
    %v306 = vld [vmem:[%s9 + $0x30] sm:$0xf]
    %v307 = vld [vmem:[%s9 + $0x34] sm:$0xf]
    %v308 = vld [vmem:[%s9 + $0x38] sm:$0xf]
    %v309 = vld [vmem:[%s9 + $0x3c] sm:$0xf]
    %v310 = vld [vmem:[%s10] sm:$0xf]
    %v311 = vld [vmem:[%s10 + $0x4] sm:$0xf]
    %v312 = vld [vmem:[%s10 + $0x8] sm:$0xf]
    %v313 = vld [vmem:[%s10 + $0xc] sm:$0xf]
    %v314 = vld [vmem:[%s10 + $0x10] sm:$0xf]
    %v315 = vld [vmem:[%s10 + $0x14] sm:$0xf]
    %v316 = vld [vmem:[%s10 + $0x18] sm:$0xf]
    %v317 = vld [vmem:[%s10 + $0x1c] sm:$0xf]
    %v318 = vld [vmem:[%s10 + $0x20] sm:$0xf]
    %v319 = vld [vmem:[%s10 + $0x24] sm:$0xf]
    %v320 = vld [vmem:[%s10 + $0x28] sm:$0xf]
    %v321 = vld [vmem:[%s10 + $0x2c] sm:$0xf]
    %v322 = vld [vmem:[%s10 + $0x30] sm:$0xf]
    %v323 = vld [vmem:[%s10 + $0x34] sm:$0xf]
    %v324 = vld [vmem:[%s10 + $0x38] sm:$0xf]
    %v325 = vld [vmem:[%s10 + $0x3c] sm:$0xf]
    %v326 = vld [vmem:[%s11] sm:$0x1]
    %v327 = vld [vmem:[#allocation2] sm:$0xf]
    %v328 = vld [vmem:[#allocation2 + $0x4] sm:$0xf]
    %v329 = vld [vmem:[#allocation2 + $0x8] sm:$0xf]
    %v330 = vld [vmem:[#allocation2 + $0xc] sm:$0xf]
    %v331 = vld [vmem:[#allocation2 + $0x10] sm:$0xf]
    %v332 = vld [vmem:[#allocation2 + $0x14] sm:$0xf]
    %v333 = vld [vmem:[#allocation2 + $0x18] sm:$0xf]
    %v334 = vld [vmem:[#allocation2 + $0x1c] sm:$0xf]
    %v335 = vld [vmem:[#allocation2 + $0x20] sm:$0xf]
    %v336 = vld [vmem:[#allocation2 + $0x24] sm:$0xf]
    %v337 = vld [vmem:[#allocation2 + $0x28] sm:$0xf]
    %v338 = vld [vmem:[#allocation2 + $0x2c] sm:$0xf]
    %v339 = vld [vmem:[#allocation2 + $0x30] sm:$0xf]
    %v340 = vld [vmem:[#allocation2 + $0x34] sm:$0xf]
    %v341 = vld [vmem:[#allocation2 + $0x38] sm:$0xf]
    %v342 = vld [vmem:[#allocation2 + $0x3c] sm:$0xf]
    %v343 = vld [vmem:[%s13] sm:$0x1]
    %v344 = vpack.c.bf16 %v287, %v287
    %v361 = vunpack.c.l.b16 %v310
    %v362 = vunpack.c.l.b16 %v311
    %v363 = vunpack.c.l.b16 %v312
    %v364 = vunpack.c.l.b16 %v313
    %v365 = vunpack.c.l.b16 %v314
    %v366 = vunpack.c.l.b16 %v315
    %v367 = vunpack.c.l.b16 %v316
    %v368 = vunpack.c.l.b16 %v317
    %v369 = vunpack.c.l.b16 %v318
    %v370 = vunpack.c.l.b16 %v319
    %v371 = vunpack.c.l.b16 %v320
    %v372 = vunpack.c.l.b16 %v321
    %v373 = vunpack.c.l.b16 %v322
    %v374 = vunpack.c.l.b16 %v323
    %v375 = vunpack.c.l.b16 %v324
    %v376 = vunpack.c.l.b16 %v325
    %v377 = vpack.c.b16 %v362, %v361
    %v378 = vpack.c.b16 %v364, %v363
    %v379 = vpack.c.b16 %v366, %v365
    %v380 = vpack.c.b16 %v368, %v367
    %v381 = vpack.c.b16 %v370, %v369
    %v382 = vpack.c.b16 %v372, %v371
    %v383 = vpack.c.b16 %v374, %v373
    %v384 = vpack.c.b16 %v376, %v375
    %393 = vmatprep.subr.bf16.mxu0 0
    %394 = vmatpush1.bf16.msra.mxu0 %v384
    %395 = vmatprep.subr.bf16.mxu0 0
    %396 = vmatpush1.bf16.msra.mxu0 %v383
    %397 = vmatprep.subr.bf16.mxu0 0
    %398 = vmatpush1.bf16.msra.mxu0 %v382
    %399 = vmatprep.subr.bf16.mxu0 0
    %400 = vmatpush1.bf16.msra.mxu0 %v381
    %401 = vmatprep.subr.bf16.mxu0 0
    %402 = vmatpush1.bf16.msra.mxu0 %v380
    %403 = vmatprep.subr.bf16.mxu0 0
    %404 = vmatpush1.bf16.msra.mxu0 %v379
    %405 = vmatprep.subr.bf16.mxu0 0
    %406 = vmatpush1.bf16.msra.mxu0 %v378
    %407 = vmatprep.subr.bf16.mxu0 0
    %408 = vmatpush1.bf16.msra.mxu0 %v377
    %409 = vmatprep.subr.bf16.mxu0 0
    %410 = vmatpush2.bf16.msra.mxu0 0
    %411 = vmatprep.subr.bf16.mxu0 0
    %412 = vmatpush2.bf16.msra.mxu0 0
    %413 = vmatprep.subr.bf16.mxu0 0
    %414 = vmatpush2.bf16.msra.mxu0 0
    %415 = vmatprep.subr.bf16.mxu0 0
    %416 = vmatpush2.bf16.msra.mxu0 0
    %417 = vmatprep.subr.bf16.mxu0 0
    %418 = vmatpush2.bf16.msra.mxu0 0
    %419 = vmatprep.subr.bf16.mxu0 0
    %420 = vmatpush2.bf16.msra.mxu0 0
    %421 = vmatprep.subr.bf16.mxu0 0
    %422 = vmatpush2.bf16.msra.mxu0 0
    %423 = vmatprep.subr.bf16.mxu0 0
    %424 = vmatpush2.bf16.msra.mxu0 0
    %425 = vmatprep.mubr.bf16.mxu0 0
    %426 = vmatmul.mubr.bf16.gmra.mxu0 %v293
    %v427 = vpop.f32.mrf.mxu0
    %v428 = vadd.f32 0.0, %v427
    %v429 = vpop.f32.mrf.mxu0
    %v430 = vpop.f32.mrf.mxu0
    %v431 = vpop.f32.mrf.mxu0
    %432 = vdwg.mxu0
    %v449 = vunpack.c.l.b16 %v294
    %v450 = vunpack.c.l.b16 %v295
    %v451 = vunpack.c.l.b16 %v296
    %v452 = vunpack.c.l.b16 %v297
    %v453 = vunpack.c.l.b16 %v298
    %v454 = vunpack.c.l.b16 %v299
    %v455 = vunpack.c.l.b16 %v300
    %v456 = vunpack.c.l.b16 %v301
    %v457 = vunpack.c.l.b16 %v302
    %v458 = vunpack.c.l.b16 %v303
    %v459 = vunpack.c.l.b16 %v304
    %v460 = vunpack.c.l.b16 %v305
    %v461 = vunpack.c.l.b16 %v306
    %v462 = vunpack.c.l.b16 %v307
    %v463 = vunpack.c.l.b16 %v308
    %v464 = vunpack.c.l.b16 %v309
    %v465 = vpack.c.b16 %v450, %v449
    %v466 = vpack.c.b16 %v452, %v451
    %v467 = vpack.c.b16 %v454, %v453
    %v468 = vpack.c.b16 %v456, %v455
    %v469 = vpack.c.b16 %v458, %v457
    %v470 = vpack.c.b16 %v460, %v459
    %v471 = vpack.c.b16 %v462, %v461
    %v472 = vpack.c.b16 %v464, %v463
    %481 = vmatprep.subr.bf16.mxu0 0
    %482 = vmatpush1.bf16.msra.mxu0 %v472
    %483 = vmatprep.subr.bf16.mxu0 0
    %484 = vmatpush1.bf16.msra.mxu0 %v471
    %485 = vmatprep.subr.bf16.mxu0 0
    %486 = vmatpush1.bf16.msra.mxu0 %v470
    %487 = vmatprep.subr.bf16.mxu0 0
    %488 = vmatpush1.bf16.msra.mxu0 %v469
    %489 = vmatprep.subr.bf16.mxu0 0
    %490 = vmatpush1.bf16.msra.mxu0 %v468
    %491 = vmatprep.subr.bf16.mxu0 0
    %492 = vmatpush1.bf16.msra.mxu0 %v467
    %493 = vmatprep.subr.bf16.mxu0 0
    %494 = vmatpush1.bf16.msra.mxu0 %v466
    %495 = vmatprep.subr.bf16.mxu0 0
    %496 = vmatpush1.bf16.msra.mxu0 %v465
    %497 = vmatprep.subr.bf16.mxu0 0
    %498 = vmatpush2.bf16.msra.mxu0 0
    %499 = vmatprep.subr.bf16.mxu0 0
    %500 = vmatpush2.bf16.msra.mxu0 0
    %501 = vmatprep.subr.bf16.mxu0 0
    %502 = vmatpush2.bf16.msra.mxu0 0
    %503 = vmatprep.subr.bf16.mxu0 0
    %504 = vmatpush2.bf16.msra.mxu0 0
    %505 = vmatprep.subr.bf16.mxu0 0
    %506 = vmatpush2.bf16.msra.mxu0 0
    %507 = vmatprep.subr.bf16.mxu0 0
    %508 = vmatpush2.bf16.msra.mxu0 0
    %509 = vmatprep.subr.bf16.mxu0 0
    %510 = vmatpush2.bf16.msra.mxu0 0
    %511 = vmatprep.subr.bf16.mxu0 0
    %512 = vmatpush2.bf16.msra.mxu0 0
    %513 = vmatprep.mubr.bf16.mxu0 0
    %514 = vmatmul.mubr.bf16.gmra.mxu0 %v344
    %v515 = vpop.f32.mrf.mxu0
    %v516 = vadd.f32 %v428, %v515
    %v517 = vpop.f32.mrf.mxu0
    %v518 = vpop.f32.mrf.mxu0
    %v519 = vpop.f32.mrf.mxu0
    %520 = vdwg.mxu0
    %v522 = vlaneseq
    %v523 = vshrl.u32 %v522, 7
    %v524 = vsub.s32 0, %v523
    %v525 = vrot.slane %v326, %v524
    %v527 = vadd.f32 %v516, %v525
    %v528 = vmax.f32 %v527, 0.0
    %v529 = vpack.c.bf16 %v528, %v528
    %v531 = vlaneseq
    %v532 = vshrl.u32 %v531, 7
    %v533 = vsub.s32 0, %v532
    %v534 = vrot.slane %v343, %v533
    %v552 = vunpack.c.l.b16 %v327
    %v553 = vunpack.c.l.b16 %v328
    %v554 = vunpack.c.l.b16 %v329
    %v555 = vunpack.c.l.b16 %v330
    %v556 = vunpack.c.l.b16 %v331
    %v557 = vunpack.c.l.b16 %v332
    %v558 = vunpack.c.l.b16 %v333
    %v559 = vunpack.c.l.b16 %v334
    %v560 = vunpack.c.l.b16 %v335
    %v561 = vunpack.c.l.b16 %v336
    %v562 = vunpack.c.l.b16 %v337
    %v563 = vunpack.c.l.b16 %v338
    %v564 = vunpack.c.l.b16 %v339
    %v565 = vunpack.c.l.b16 %v340
    %v566 = vunpack.c.l.b16 %v341
    %v567 = vunpack.c.l.b16 %v342
    %v568 = vpack.c.b16 %v553, %v552
    %v569 = vpack.c.b16 %v555, %v554
    %v570 = vpack.c.b16 %v557, %v556
    %v571 = vpack.c.b16 %v559, %v558
    %v572 = vpack.c.b16 %v561, %v560
    %v573 = vpack.c.b16 %v563, %v562
    %v574 = vpack.c.b16 %v565, %v564
    %v575 = vpack.c.b16 %v567, %v566
    %584 = vmatprep.subr.bf16.mxu0 0
    %585 = vmatpush1.bf16.msra.mxu0 %v575
    %586 = vmatprep.subr.bf16.mxu0 0
    %587 = vmatpush1.bf16.msra.mxu0 %v574
    %588 = vmatprep.subr.bf16.mxu0 0
    %589 = vmatpush1.bf16.msra.mxu0 %v573
    %590 = vmatprep.subr.bf16.mxu0 0
    %591 = vmatpush1.bf16.msra.mxu0 %v572
    %592 = vmatprep.subr.bf16.mxu0 0
    %593 = vmatpush1.bf16.msra.mxu0 %v571
    %594 = vmatprep.subr.bf16.mxu0 0
    %595 = vmatpush1.bf16.msra.mxu0 %v570
    %596 = vmatprep.subr.bf16.mxu0 0
    %597 = vmatpush1.bf16.msra.mxu0 %v569
    %598 = vmatprep.subr.bf16.mxu0 0
    %599 = vmatpush1.bf16.msra.mxu0 %v568
    %600 = vmatprep.subr.bf16.mxu0 0
    %601 = vmatpush2.bf16.msra.mxu0 0
    %602 = vmatprep.subr.bf16.mxu0 0
    %603 = vmatpush2.bf16.msra.mxu0 0
    %604 = vmatprep.subr.bf16.mxu0 0
    %605 = vmatpush2.bf16.msra.mxu0 0
    %606 = vmatprep.subr.bf16.mxu0 0
    %607 = vmatpush2.bf16.msra.mxu0 0
    %608 = vmatprep.subr.bf16.mxu0 0
    %609 = vmatpush2.bf16.msra.mxu0 0
    %610 = vmatprep.subr.bf16.mxu0 0
    %611 = vmatpush2.bf16.msra.mxu0 0
    %612 = vmatprep.subr.bf16.mxu0 0
    %613 = vmatpush2.bf16.msra.mxu0 0
    %614 = vmatprep.subr.bf16.mxu0 0
    %615 = vmatpush2.bf16.msra.mxu0 0
    %616 = vmatprep.mubr.bf16.mxu0 0
    %617 = vmatmul.mubr.bf16.gmra.mxu0 %v529
    %v618 = vpop.f32.mrf.mxu0
    %v619 = vadd.f32 %v534, %v618
    %v620 = vpop.f32.mrf.mxu0
    %v621 = vpop.f32.mrf.mxu0
    %v622 = vpop.f32.mrf.mxu0
    %623 = vdwg.mxu0
    %624 = vst [vmem:[%s16] sm:$0xff] %v619
    %v625 = vld [vmem:[%s9] sm:$0xf]
    %v626 = vld [vmem:[%s9 + $0x4] sm:$0xf]
    %v627 = vld [vmem:[%s9 + $0x8] sm:$0xf]
    %v628 = vld [vmem:[%s9 + $0xc] sm:$0xf]
    %v629 = vld [vmem:[%s9 + $0x10] sm:$0xf]
    %v630 = vld [vmem:[%s9 + $0x14] sm:$0xf]
    %v631 = vld [vmem:[%s9 + $0x18] sm:$0xf]
    %v632 = vld [vmem:[%s9 + $0x1c] sm:$0xf]
    %v633 = vld [vmem:[%s9 + $0x20] sm:$0xf]
    %v634 = vld [vmem:[%s9 + $0x24] sm:$0xf]
    %v635 = vld [vmem:[%s9 + $0x28] sm:$0xf]
    %v636 = vld [vmem:[%s9 + $0x2c] sm:$0xf]
    %v637 = vld [vmem:[%s9 + $0x30] sm:$0xf]
    %v638 = vld [vmem:[%s9 + $0x34] sm:$0xf]
    %v639 = vld [vmem:[%s9 + $0x38] sm:$0xf]
    %v640 = vld [vmem:[%s9 + $0x3c] sm:$0xf]
    %v641 = vld [vmem:[%s11] sm:$0x1]
    %v642 = vld [vmem:[#allocation2] sm:$0xf]
    %v643 = vld [vmem:[#allocation2 + $0x4] sm:$0xf]
    %v644 = vld [vmem:[#allocation2 + $0x8] sm:$0xf]
    %v645 = vld [vmem:[#allocation2 + $0xc] sm:$0xf]
    %v646 = vld [vmem:[#allocation2 + $0x10] sm:$0xf]
    %v647 = vld [vmem:[#allocation2 + $0x14] sm:$0xf]
    %v648 = vld [vmem:[#allocation2 + $0x18] sm:$0xf]
    %v649 = vld [vmem:[#allocation2 + $0x1c] sm:$0xf]
    %v650 = vld [vmem:[#allocation2 + $0x20] sm:$0xf]
    %v651 = vld [vmem:[#allocation2 + $0x24] sm:$0xf]
    %v652 = vld [vmem:[#allocation2 + $0x28] sm:$0xf]
    %v653 = vld [vmem:[#allocation2 + $0x2c] sm:$0xf]
    %v654 = vld [vmem:[#allocation2 + $0x30] sm:$0xf]
    %v655 = vld [vmem:[#allocation2 + $0x34] sm:$0xf]
    %v656 = vld [vmem:[#allocation2 + $0x38] sm:$0xf]
    %v657 = vld [vmem:[#allocation2 + $0x3c] sm:$0xf]
    %v658 = vld [vmem:[%s13] sm:$0x1]
    %v660 = vlaneseq
    %v661 = vshrl.u32 %v660, 7
    %v662 = vsub.s32 0, %v661
    %v663 = vrot.slane %v641, %v662
    %v681 = vunpack.c.l.b16 %v625
    %v682 = vunpack.c.l.b16 %v626
    %v683 = vunpack.c.l.b16 %v627
    %v684 = vunpack.c.l.b16 %v628
    %v685 = vunpack.c.l.b16 %v629
    %v686 = vunpack.c.l.b16 %v630
    %v687 = vunpack.c.l.b16 %v631
    %v688 = vunpack.c.l.b16 %v632
    %v689 = vunpack.c.l.b16 %v633
    %v690 = vunpack.c.l.b16 %v634
    %v691 = vunpack.c.l.b16 %v635
    %v692 = vunpack.c.l.b16 %v636
    %v693 = vunpack.c.l.b16 %v637
    %v694 = vunpack.c.l.b16 %v638
    %v695 = vunpack.c.l.b16 %v639
    %v696 = vunpack.c.l.b16 %v640
    %v697 = vpack.c.b16 %v682, %v681
    %v698 = vpack.c.b16 %v684, %v683
    %v699 = vpack.c.b16 %v686, %v685
    %v700 = vpack.c.b16 %v688, %v687
    %v701 = vpack.c.b16 %v690, %v689
    %v702 = vpack.c.b16 %v692, %v691
    %v703 = vpack.c.b16 %v694, %v693
    %v704 = vpack.c.b16 %v696, %v695
    %713 = vmatprep.subr.bf16.mxu0 0
    %714 = vmatpush1.bf16.msra.mxu0 %v704
    %715 = vmatprep.subr.bf16.mxu0 0
    %716 = vmatpush1.bf16.msra.mxu0 %v703
    %717 = vmatprep.subr.bf16.mxu0 0
    %718 = vmatpush1.bf16.msra.mxu0 %v702
    %719 = vmatprep.subr.bf16.mxu0 0
    %720 = vmatpush1.bf16.msra.mxu0 %v701
    %721 = vmatprep.subr.bf16.mxu0 0
    %722 = vmatpush1.bf16.msra.mxu0 %v700
    %723 = vmatprep.subr.bf16.mxu0 0
    %724 = vmatpush1.bf16.msra.mxu0 %v699
    %725 = vmatprep.subr.bf16.mxu0 0
    %726 = vmatpush1.bf16.msra.mxu0 %v698
    %727 = vmatprep.subr.bf16.mxu0 0
    %728 = vmatpush1.bf16.msra.mxu0 %v697
    %729 = vmatprep.subr.bf16.mxu0 0
    %730 = vmatpush2.bf16.msra.mxu0 0
    %731 = vmatprep.subr.bf16.mxu0 0
    %732 = vmatpush2.bf16.msra.mxu0 0
    %733 = vmatprep.subr.bf16.mxu0 0
    %734 = vmatpush2.bf16.msra.mxu0 0
    %735 = vmatprep.subr.bf16.mxu0 0
    %736 = vmatpush2.bf16.msra.mxu0 0
    %737 = vmatprep.subr.bf16.mxu0 0
    %738 = vmatpush2.bf16.msra.mxu0 0
    %739 = vmatprep.subr.bf16.mxu0 0
    %740 = vmatpush2.bf16.msra.mxu0 0
    %741 = vmatprep.subr.bf16.mxu0 0
    %742 = vmatpush2.bf16.msra.mxu0 0
    %743 = vmatprep.subr.bf16.mxu0 0
    %744 = vmatpush2.bf16.msra.mxu0 0
    %745 = vmatprep.mubr.bf16.mxu0 0
    %746 = vmatmul.mubr.bf16.gmra.mxu0 %v67
    %v747 = vpop.f32.mrf.mxu0
    %v748 = vadd.f32 %v663, %v747
    %v749 = vpop.f32.mrf.mxu0
    %v750 = vpop.f32.mrf.mxu0
    %v751 = vpop.f32.mrf.mxu0
    %752 = vdwg.mxu0
    %v753 = vmax.f32 %v748, 0.0
    %v754 = vpack.c.bf16 %v753, %v753
    %v756 = vlaneseq
    %v757 = vshrl.u32 %v756, 7
    %v758 = vsub.s32 0, %v757
    %v759 = vrot.slane %v658, %v758
    %v777 = vunpack.c.l.b16 %v642
    %v778 = vunpack.c.l.b16 %v643
    %v779 = vunpack.c.l.b16 %v644
    %v780 = vunpack.c.l.b16 %v645
    %v781 = vunpack.c.l.b16 %v646
    %v782 = vunpack.c.l.b16 %v647
    %v783 = vunpack.c.l.b16 %v648
    %v784 = vunpack.c.l.b16 %v649
    %v785 = vunpack.c.l.b16 %v650
    %v786 = vunpack.c.l.b16 %v651
    %v787 = vunpack.c.l.b16 %v652
    %v788 = vunpack.c.l.b16 %v653
    %v789 = vunpack.c.l.b16 %v654
    %v790 = vunpack.c.l.b16 %v655
    %v791 = vunpack.c.l.b16 %v656
    %v792 = vunpack.c.l.b16 %v657
    %v793 = vpack.c.b16 %v778, %v777
    %v794 = vpack.c.b16 %v780, %v779
    %v795 = vpack.c.b16 %v782, %v781
    %v796 = vpack.c.b16 %v784, %v783
    %v797 = vpack.c.b16 %v786, %v785
    %v798 = vpack.c.b16 %v788, %v787
    %v799 = vpack.c.b16 %v790, %v789
    %v800 = vpack.c.b16 %v792, %v791
    %809 = vmatprep.subr.bf16.mxu0 0
    %810 = vmatpush1.bf16.msra.mxu0 %v800
    %811 = vmatprep.subr.bf16.mxu0 0
    %812 = vmatpush1.bf16.msra.mxu0 %v799
    %813 = vmatprep.subr.bf16.mxu0 0
    %814 = vmatpush1.bf16.msra.mxu0 %v798
    %815 = vmatprep.subr.bf16.mxu0 0
    %816 = vmatpush1.bf16.msra.mxu0 %v797
    %817 = vmatprep.subr.bf16.mxu0 0
    %818 = vmatpush1.bf16.msra.mxu0 %v796
    %819 = vmatprep.subr.bf16.mxu0 0
    %820 = vmatpush1.bf16.msra.mxu0 %v795
    %821 = vmatprep.subr.bf16.mxu0 0
    %822 = vmatpush1.bf16.msra.mxu0 %v794
    %823 = vmatprep.subr.bf16.mxu0 0
    %824 = vmatpush1.bf16.msra.mxu0 %v793
    %825 = vmatprep.subr.bf16.mxu0 0
    %826 = vmatpush2.bf16.msra.mxu0 0
    %827 = vmatprep.subr.bf16.mxu0 0
    %828 = vmatpush2.bf16.msra.mxu0 0
    %829 = vmatprep.subr.bf16.mxu0 0
    %830 = vmatpush2.bf16.msra.mxu0 0
    %831 = vmatprep.subr.bf16.mxu0 0
    %832 = vmatpush2.bf16.msra.mxu0 0
    %833 = vmatprep.subr.bf16.mxu0 0
    %834 = vmatpush2.bf16.msra.mxu0 0
    %835 = vmatprep.subr.bf16.mxu0 0
    %836 = vmatpush2.bf16.msra.mxu0 0
    %837 = vmatprep.subr.bf16.mxu0 0
    %838 = vmatpush2.bf16.msra.mxu0 0
    %839 = vmatprep.subr.bf16.mxu0 0
    %840 = vmatpush2.bf16.msra.mxu0 0
    %841 = vmatprep.mubr.bf16.mxu0 0
    %842 = vmatmul.mubr.bf16.gmra.mxu0 %v754
    %v843 = vpop.f32.mrf.mxu0
    %v844 = vadd.f32 %v759, %v843
    %v845 = vpop.f32.mrf.mxu0
    %v846 = vpop.f32.mrf.mxu0
    %v847 = vpop.f32.mrf.mxu0
    %848 = vdwg.mxu0
    %849 = vst [vmem:[%s15] sm:$0xff] %v844
    %v850 = vld [vmem:[%s3] sm:$0xf]
    %v851 = vld [vmem:[%s4] sm:$0xf]
    %v852 = vld [vmem:[%s4 + $0x4] sm:$0xf]
    %v853 = vld [vmem:[%s4 + $0x8] sm:$0xf]
    %v854 = vld [vmem:[%s4 + $0xc] sm:$0xf]
    %v855 = vld [vmem:[%s4 + $0x10] sm:$0xf]
    %v856 = vld [vmem:[%s4 + $0x14] sm:$0xf]
    %v857 = vld [vmem:[%s4 + $0x18] sm:$0xf]
    %v858 = vld [vmem:[%s4 + $0x1c] sm:$0xf]
    %v859 = vld [vmem:[%s4 + $0x20] sm:$0xf]
    %v860 = vld [vmem:[%s4 + $0x24] sm:$0xf]
    %v861 = vld [vmem:[%s4 + $0x28] sm:$0xf]
    %v862 = vld [vmem:[%s4 + $0x2c] sm:$0xf]
    %v863 = vld [vmem:[%s4 + $0x30] sm:$0xf]
    %v864 = vld [vmem:[%s4 + $0x34] sm:$0xf]
    %v865 = vld [vmem:[%s4 + $0x38] sm:$0xf]
    %v866 = vld [vmem:[%s4 + $0x3c] sm:$0xf]
    %v867 = vld [vmem:[%s5] sm:$0xf]
    %v868 = vld [vmem:[%s5 + $0x4] sm:$0xf]
    %v869 = vld [vmem:[%s5 + $0x8] sm:$0xf]
    %v870 = vld [vmem:[%s5 + $0xc] sm:$0xf]
    %v871 = vld [vmem:[%s5 + $0x10] sm:$0xf]
    %v872 = vld [vmem:[%s5 + $0x14] sm:$0xf]
    %v873 = vld [vmem:[%s5 + $0x18] sm:$0xf]
    %v874 = vld [vmem:[%s5 + $0x1c] sm:$0xf]
    %v875 = vld [vmem:[%s5 + $0x20] sm:$0xf]
    %v876 = vld [vmem:[%s5 + $0x24] sm:$0xf]
    %v877 = vld [vmem:[%s5 + $0x28] sm:$0xf]
    %v878 = vld [vmem:[%s5 + $0x2c] sm:$0xf]
    %v879 = vld [vmem:[%s5 + $0x30] sm:$0xf]
    %v880 = vld [vmem:[%s5 + $0x34] sm:$0xf]
    %v881 = vld [vmem:[%s5 + $0x38] sm:$0xf]
    %v882 = vld [vmem:[%s5 + $0x3c] sm:$0xf]
    %v883 = vld [vmem:[%s6] sm:$0x1]
    %v884 = vld [vmem:[%s7] sm:$0xf]
    %v885 = vld [vmem:[%s7 + $0x4] sm:$0xf]
    %v886 = vld [vmem:[%s7 + $0x8] sm:$0xf]
    %v887 = vld [vmem:[%s7 + $0xc] sm:$0xf]
    %v888 = vld [vmem:[%s7 + $0x10] sm:$0xf]
    %v889 = vld [vmem:[%s7 + $0x14] sm:$0xf]
    %v890 = vld [vmem:[%s7 + $0x18] sm:$0xf]
    %v891 = vld [vmem:[%s7 + $0x1c] sm:$0xf]
    %v892 = vld [vmem:[%s7 + $0x20] sm:$0xf]
    %v893 = vld [vmem:[%s7 + $0x24] sm:$0xf]
    %v894 = vld [vmem:[%s7 + $0x28] sm:$0xf]
    %v895 = vld [vmem:[%s7 + $0x2c] sm:$0xf]
    %v896 = vld [vmem:[%s7 + $0x30] sm:$0xf]
    %v897 = vld [vmem:[%s7 + $0x34] sm:$0xf]
    %v898 = vld [vmem:[%s7 + $0x38] sm:$0xf]
    %v899 = vld [vmem:[%s7 + $0x3c] sm:$0xf]
    %v900 = vld [vmem:[%s8] sm:$0x1]
    %v901 = vpack.c.bf16 %v844, %v844
    %v918 = vunpack.c.l.b16 %v867
    %v919 = vunpack.c.l.b16 %v868
    %v920 = vunpack.c.l.b16 %v869
    %v921 = vunpack.c.l.b16 %v870
    %v922 = vunpack.c.l.b16 %v871
    %v923 = vunpack.c.l.b16 %v872
    %v924 = vunpack.c.l.b16 %v873
    %v925 = vunpack.c.l.b16 %v874
    %v926 = vunpack.c.l.b16 %v875
    %v927 = vunpack.c.l.b16 %v876
    %v928 = vunpack.c.l.b16 %v877
    %v929 = vunpack.c.l.b16 %v878
    %v930 = vunpack.c.l.b16 %v879
    %v931 = vunpack.c.l.b16 %v880
    %v932 = vunpack.c.l.b16 %v881
    %v933 = vunpack.c.l.b16 %v882
    %v934 = vpack.c.b16 %v919, %v918
    %v935 = vpack.c.b16 %v921, %v920
    %v936 = vpack.c.b16 %v923, %v922
    %v937 = vpack.c.b16 %v925, %v924
    %v938 = vpack.c.b16 %v927, %v926
    %v939 = vpack.c.b16 %v929, %v928
    %v940 = vpack.c.b16 %v931, %v930
    %v941 = vpack.c.b16 %v933, %v932
    %950 = vmatprep.subr.bf16.mxu0 0
    %951 = vmatpush1.bf16.msra.mxu0 %v941
    %952 = vmatprep.subr.bf16.mxu0 0
    %953 = vmatpush1.bf16.msra.mxu0 %v940
    %954 = vmatprep.subr.bf16.mxu0 0
    %955 = vmatpush1.bf16.msra.mxu0 %v939
    %956 = vmatprep.subr.bf16.mxu0 0
    %957 = vmatpush1.bf16.msra.mxu0 %v938
    %958 = vmatprep.subr.bf16.mxu0 0
    %959 = vmatpush1.bf16.msra.mxu0 %v937
    %960 = vmatprep.subr.bf16.mxu0 0
    %961 = vmatpush1.bf16.msra.mxu0 %v936
    %962 = vmatprep.subr.bf16.mxu0 0
    %963 = vmatpush1.bf16.msra.mxu0 %v935
    %964 = vmatprep.subr.bf16.mxu0 0
    %965 = vmatpush1.bf16.msra.mxu0 %v934
    %966 = vmatprep.subr.bf16.mxu0 0
    %967 = vmatpush2.bf16.msra.mxu0 0
    %968 = vmatprep.subr.bf16.mxu0 0
    %969 = vmatpush2.bf16.msra.mxu0 0
    %970 = vmatprep.subr.bf16.mxu0 0
    %971 = vmatpush2.bf16.msra.mxu0 0
    %972 = vmatprep.subr.bf16.mxu0 0
    %973 = vmatpush2.bf16.msra.mxu0 0
    %974 = vmatprep.subr.bf16.mxu0 0
    %975 = vmatpush2.bf16.msra.mxu0 0
    %976 = vmatprep.subr.bf16.mxu0 0
    %977 = vmatpush2.bf16.msra.mxu0 0
    %978 = vmatprep.subr.bf16.mxu0 0
    %979 = vmatpush2.bf16.msra.mxu0 0
    %980 = vmatprep.subr.bf16.mxu0 0
    %981 = vmatpush2.bf16.msra.mxu0 0
    %982 = vmatprep.mubr.bf16.mxu0 0
    %983 = vmatmul.mubr.bf16.gmra.mxu0 %v850
    %v984 = vpop.f32.mrf.mxu0
    %v985 = vadd.f32 0.0, %v984
    %v986 = vpop.f32.mrf.mxu0
    %v987 = vpop.f32.mrf.mxu0
    %v988 = vpop.f32.mrf.mxu0
    %989 = vdwg.mxu0
    %v1006 = vunpack.c.l.b16 %v851
    %v1007 = vunpack.c.l.b16 %v852
    %v1008 = vunpack.c.l.b16 %v853
    %v1009 = vunpack.c.l.b16 %v854
    %v1010 = vunpack.c.l.b16 %v855
    %v1011 = vunpack.c.l.b16 %v856
    %v1012 = vunpack.c.l.b16 %v857
    %v1013 = vunpack.c.l.b16 %v858
    %v1014 = vunpack.c.l.b16 %v859
    %v1015 = vunpack.c.l.b16 %v860
    %v1016 = vunpack.c.l.b16 %v861
    %v1017 = vunpack.c.l.b16 %v862
    %v1018 = vunpack.c.l.b16 %v863
    %v1019 = vunpack.c.l.b16 %v864
    %v1020 = vunpack.c.l.b16 %v865
    %v1021 = vunpack.c.l.b16 %v866
    %v1022 = vpack.c.b16 %v1007, %v1006
    %v1023 = vpack.c.b16 %v1009, %v1008
    %v1024 = vpack.c.b16 %v1011, %v1010
    %v1025 = vpack.c.b16 %v1013, %v1012
    %v1026 = vpack.c.b16 %v1015, %v1014
    %v1027 = vpack.c.b16 %v1017, %v1016
    %v1028 = vpack.c.b16 %v1019, %v1018
    %v1029 = vpack.c.b16 %v1021, %v1020
    %1038 = vmatprep.subr.bf16.mxu0 0
    %1039 = vmatpush1.bf16.msra.mxu0 %v1029
    %1040 = vmatprep.subr.bf16.mxu0 0
    %1041 = vmatpush1.bf16.msra.mxu0 %v1028
    %1042 = vmatprep.subr.bf16.mxu0 0
    %1043 = vmatpush1.bf16.msra.mxu0 %v1027
    %1044 = vmatprep.subr.bf16.mxu0 0
    %1045 = vmatpush1.bf16.msra.mxu0 %v1026
    %1046 = vmatprep.subr.bf16.mxu0 0
    %1047 = vmatpush1.bf16.msra.mxu0 %v1025
    %1048 = vmatprep.subr.bf16.mxu0 0
    %1049 = vmatpush1.bf16.msra.mxu0 %v1024
    %1050 = vmatprep.subr.bf16.mxu0 0
    %1051 = vmatpush1.bf16.msra.mxu0 %v1023
    %1052 = vmatprep.subr.bf16.mxu0 0
    %1053 = vmatpush1.bf16.msra.mxu0 %v1022
    %1054 = vmatprep.subr.bf16.mxu0 0
    %1055 = vmatpush2.bf16.msra.mxu0 0
    %1056 = vmatprep.subr.bf16.mxu0 0
    %1057 = vmatpush2.bf16.msra.mxu0 0
    %1058 = vmatprep.subr.bf16.mxu0 0
    %1059 = vmatpush2.bf16.msra.mxu0 0
    %1060 = vmatprep.subr.bf16.mxu0 0
    %1061 = vmatpush2.bf16.msra.mxu0 0
    %1062 = vmatprep.subr.bf16.mxu0 0
    %1063 = vmatpush2.bf16.msra.mxu0 0
    %1064 = vmatprep.subr.bf16.mxu0 0
    %1065 = vmatpush2.bf16.msra.mxu0 0
    %1066 = vmatprep.subr.bf16.mxu0 0
    %1067 = vmatpush2.bf16.msra.mxu0 0
    %1068 = vmatprep.subr.bf16.mxu0 0
    %1069 = vmatpush2.bf16.msra.mxu0 0
    %1070 = vmatprep.mubr.bf16.mxu0 0
    %1071 = vmatmul.mubr.bf16.gmra.mxu0 %v901
    %v1072 = vpop.f32.mrf.mxu0
    %v1073 = vadd.f32 %v985, %v1072
    %v1074 = vpop.f32.mrf.mxu0
    %v1075 = vpop.f32.mrf.mxu0
    %v1076 = vpop.f32.mrf.mxu0
    %1077 = vdwg.mxu0
    %v1079 = vlaneseq
    %v1080 = vshrl.u32 %v1079, 7
    %v1081 = vsub.s32 0, %v1080
    %v1082 = vrot.slane %v883, %v1081
    %v1084 = vadd.f32 %v1073, %v1082
    %v1085 = vmax.f32 %v1084, 0.0
    %v1086 = vpack.c.bf16 %v1085, %v1085
    %v1088 = vlaneseq
    %v1089 = vshrl.u32 %v1088, 7
    %v1090 = vsub.s32 0, %v1089
    %v1091 = vrot.slane %v900, %v1090
    %v1109 = vunpack.c.l.b16 %v884
    %v1110 = vunpack.c.l.b16 %v885
    %v1111 = vunpack.c.l.b16 %v886
    %v1112 = vunpack.c.l.b16 %v887
    %v1113 = vunpack.c.l.b16 %v888
    %v1114 = vunpack.c.l.b16 %v889
    %v1115 = vunpack.c.l.b16 %v890
    %v1116 = vunpack.c.l.b16 %v891
    %v1117 = vunpack.c.l.b16 %v892
    %v1118 = vunpack.c.l.b16 %v893
    %v1119 = vunpack.c.l.b16 %v894
    %v1120 = vunpack.c.l.b16 %v895
    %v1121 = vunpack.c.l.b16 %v896
    %v1122 = vunpack.c.l.b16 %v897
    %v1123 = vunpack.c.l.b16 %v898
    %v1124 = vunpack.c.l.b16 %v899
    %v1125 = vpack.c.b16 %v1110, %v1109
    %v1126 = vpack.c.b16 %v1112, %v1111
    %v1127 = vpack.c.b16 %v1114, %v1113
    %v1128 = vpack.c.b16 %v1116, %v1115
    %v1129 = vpack.c.b16 %v1118, %v1117
    %v1130 = vpack.c.b16 %v1120, %v1119
    %v1131 = vpack.c.b16 %v1122, %v1121
    %v1132 = vpack.c.b16 %v1124, %v1123
    %1141 = vmatprep.subr.bf16.mxu0 0
    %1142 = vmatpush1.bf16.msra.mxu0 %v1132
    %1143 = vmatprep.subr.bf16.mxu0 0
    %1144 = vmatpush1.bf16.msra.mxu0 %v1131
    %1145 = vmatprep.subr.bf16.mxu0 0
    %1146 = vmatpush1.bf16.msra.mxu0 %v1130
    %1147 = vmatprep.subr.bf16.mxu0 0
    %1148 = vmatpush1.bf16.msra.mxu0 %v1129
    %1149 = vmatprep.subr.bf16.mxu0 0
    %1150 = vmatpush1.bf16.msra.mxu0 %v1128
    %1151 = vmatprep.subr.bf16.mxu0 0
    %1152 = vmatpush1.bf16.msra.mxu0 %v1127
    %1153 = vmatprep.subr.bf16.mxu0 0
    %1154 = vmatpush1.bf16.msra.mxu0 %v1126
    %1155 = vmatprep.subr.bf16.mxu0 0
    %1156 = vmatpush1.bf16.msra.mxu0 %v1125
    %1157 = vmatprep.subr.bf16.mxu0 0
    %1158 = vmatpush2.bf16.msra.mxu0 0
    %1159 = vmatprep.subr.bf16.mxu0 0
    %1160 = vmatpush2.bf16.msra.mxu0 0
    %1161 = vmatprep.subr.bf16.mxu0 0
    %1162 = vmatpush2.bf16.msra.mxu0 0
    %1163 = vmatprep.subr.bf16.mxu0 0
    %1164 = vmatpush2.bf16.msra.mxu0 0
    %1165 = vmatprep.subr.bf16.mxu0 0
    %1166 = vmatpush2.bf16.msra.mxu0 0
    %1167 = vmatprep.subr.bf16.mxu0 0
    %1168 = vmatpush2.bf16.msra.mxu0 0
    %1169 = vmatprep.subr.bf16.mxu0 0
    %1170 = vmatpush2.bf16.msra.mxu0 0
    %1171 = vmatprep.subr.bf16.mxu0 0
    %1172 = vmatpush2.bf16.msra.mxu0 0
    %1173 = vmatprep.mubr.bf16.mxu0 0
    %1174 = vmatmul.mubr.bf16.gmra.mxu0 %v1086
    %v1175 = vpop.f32.mrf.mxu0
    %v1176 = vadd.f32 %v1091, %v1175
    %v1177 = vpop.f32.mrf.mxu0
    %v1178 = vpop.f32.mrf.mxu0
    %v1179 = vpop.f32.mrf.mxu0
    %1180 = vdwg.mxu0
    %1181 = vst [vmem:[%s17] sm:$0xff] %v1176
    // Predicated region
    $region62: #{cgn_forward.1} parent=1 // pred_check
      _
    $region63: #{cgn_forward.1} parent=1 // pred_check_branch
      %1183 = sbr.rel (0) target = $region65
    $region64: #{cgn_forward.1} parent=1 // pred_region
      _
    $region65: #{cgn_forward.1} parent=1 // pred_fallthru
      _
    // Predicated region
    $region66: #{cgn_forward.1} parent=1 // pred_check
      _
    $region67: #{cgn_forward.1} parent=1 // pred_check_branch
      %1185 = sbr.rel (0) target = $region69
    $region68: #{cgn_forward.1} parent=1 // pred_region
      _
    $region69: #{cgn_forward.1} parent=1 // pred_fallthru
      _
    // Predicated region
    $region70: #{cgn_forward.1} parent=1 // pred_check
      _
    $region71: #{cgn_forward.1} parent=1 // pred_check_branch
      %1187 = sbr.rel (0) target = $region73
    $region72: #{cgn_forward.1} parent=1 // pred_region
      _
    $region73: #{cgn_forward.1} parent=1 // pred_fallthru
      _
    // Predicated region
    $region74: #{cgn_forward.1} parent=1 // pred_check
      _
    $region75: #{cgn_forward.1} parent=1 // pred_check_branch
      %1189 = sbr.rel (0) target = $region77
    $region76: #{cgn_forward.1} parent=1 // pred_region
      _
    $region77: #{cgn_forward.1} parent=1 // pred_fallthru
      _
    // Predicated region
    $region78: #{cgn_forward.1} parent=1 // pred_check
      _
    $region79: #{cgn_forward.1} parent=1 // pred_check_branch
      %1191 = sbr.rel (0) target = $region81
    $region80: #{cgn_forward.1} parent=1 // pred_region
      _
    $region81: #{cgn_forward.1} parent=1 // pred_fallthru
      _
    // Predicated region
    $region82: #{cgn_forward.1} parent=1 // pred_check
      _
    $region83: #{cgn_forward.1} parent=1 // pred_check_branch
      %1193 = sbr.rel (0) target = $region85
    $region84: #{cgn_forward.1} parent=1 // pred_region
      _
    $region85: #{cgn_forward.1} parent=1 // pred_fallthru
      _
    // Predicated region
    $region86: #{cgn_forward.1} parent=1 // pred_check
      _
    $region87: #{cgn_forward.1} parent=1 // pred_check_branch
      %1195 = sbr.rel (0) target = $region89
    $region88: #{cgn_forward.1} parent=1 // pred_region
      _
    $region89: #{cgn_forward.1} parent=1 // pred_fallthru
      _
    // Predicated region
    $region90: #{cgn_forward.1} parent=1 // pred_check
      _
    $region91: #{cgn_forward.1} parent=1 // pred_check_branch
      %1197 = sbr.rel (0) target = $region93
    $region92: #{cgn_forward.1} parent=1 // pred_region
      _
    $region93: #{cgn_forward.1} parent=1 // pred_fallthru
      _
    %1198 = vsyncpa [#allocation3], 1

</llo_original>
